<compile_context>
chip_gen: v7x
topology: tpu7x:2x2x1
jax: 0.10.0
libtpu: 0.0.40
codegen_flags: <defaults>
</compile_context>

<pallas_src>
import jax
import jax.numpy as jnp
from jax.experimental import pallas as pl
from jax.experimental.pallas import tpu as pltpu


def se_gate_kernel(xvec_ref, w_ref, b_ref, x_ref, o_ref):
    # xvec_ref: [1, C_in]      (same block for every grid step)
    # w_ref:    [TC, C_in]     (channel tile of the 1x1-conv weight)
    # b_ref:    [TC, 1]        (channel tile of the bias)
    # x_ref:    [TC, HW]       (channel tile of the feature map, channel-major)
    # o_ref:    [TC, HW]
    w = w_ref[...].astype(jnp.float32)                      # upcast for VPU (v5e-safe)
    xv = xvec_ref[...].astype(jnp.float32)                  # [1, C_in]
    # 1x1 conv at 1x1 spatial == per-out-channel dot: VPU mul + lane reduce (XLU).
    s = jnp.sum(w * xv, axis=-1, keepdims=True)             # [TC, 1]
    gate = jax.nn.sigmoid(s + b_ref[...].astype(jnp.float32))  # [TC, 1] (EUP)
    # Broadcast gate over the spatial (lane) axis; channel-wise multiply.
    o_ref[...] = (x_ref[...].astype(jnp.float32) * gate).astype(o_ref.dtype)


def se_module(x372, x369, weight, bias, *, tile_c=768):
    """x372: [N, C_in, 1, 1], x369: [N, C_out, H, W], weight: [C_out, C_in, 1, 1].

    tile_c=768 -> grid=(2,): one tile per TensorCore on v7x, near-zero loop
    overhead on v5e/v6e.  (tile_c=1536 / grid=(1,) is a valid single-step
    variant for single-TC chips; difference is ~0.35 us.)
    """
    N, C_in, _, _ = x372.shape
    _, C_out, H, W = x369.shape
    assert N == 1, "synthetic module uses batch 1"
    assert C_out % tile_c == 0
    HW = H * W

    # All of these are layout-free reshapes (no transposes / relayouts).
    xvec = x372.reshape(1, C_in)                  # [1, 64]
    w = weight.reshape(C_out, C_in)               # [1536, 64]
    b = bias.reshape(C_out, 1)                    # [1536, 1]
    x_cm = x369.reshape(C_out, HW)                # [1536, 49]  (channel-major)

    grid = (C_out // tile_c,)

    itemsize = jnp.dtype(x369.dtype).itemsize
    w_itemsize = jnp.dtype(weight.dtype).itemsize
    cost = pl.CostEstimate(
        flops=2 * C_out * C_in + C_out * HW,
        transcendentals=C_out,
        bytes_accessed=(C_in * itemsize
                        + C_out * C_in * w_itemsize
                        + C_out * w_itemsize
                        + 2 * C_out * HW * itemsize),
    )

    out_cm = pl.pallas_call(
        se_gate_kernel,
        out_shape=jax.ShapeDtypeStruct((C_out, HW), x369.dtype),
        grid=grid,
        in_specs=[
            pl.BlockSpec((1, C_in), lambda i: (0, 0)),        # input vec (same every step)
            pl.BlockSpec((tile_c, C_in), lambda i: (i, 0)),   # conv weight tile
            pl.BlockSpec((tile_c, 1), lambda i: (i, 0)),      # conv bias tile
            pl.BlockSpec((tile_c, HW), lambda i: (i, 0)),     # feature-map tile
        ],
        out_specs=pl.BlockSpec((tile_c, HW), lambda i: (i, 0)),
        compiler_params=pltpu.CompilerParams(
            dimension_semantics=("parallel",),
        ),
        cost_estimate=cost,
    )(xvec, w, b, x_cm)

    return out_cm.reshape(N, C_out, H, W)


if __name__ == "__main__":
    C_in, C_out, H, W = 64, 1536, 7, 7

    key = jax.random.PRNGKey(0)
    k1, k2, k3, k4 = jax.random.split(key, 4)

    # Inputs (shapes implied by the module's forward).
    x372 = jax.random.normal(k1, (1, C_in, 1, 1), jnp.float32)
    x369 = jax.random.normal(k2, (1, C_out, H, W), jnp.float32)

    # Deterministic Conv2d(64, 1536, 1) parameters (uniform, PyTorch-style bound).
    bound = 1.0 / (C_in ** 0.5)
    weight = jax.random.uniform(k3, (C_out, C_in, 1, 1), jnp.float32, -bound, bound)
    bias = jax.random.uniform(k4, (C_out,), jnp.float32, -bound, bound)

    out = se_module(x372, x369, weight, bias)
    out = jax.block_until_ready(out)

    # Pure-JAX reference check.
    gate = jax.nn.sigmoid(
        jnp.einsum("oi,i->o", weight.reshape(C_out, C_in), x372.reshape(C_in)) + bias
    )
    ref = gate.reshape(1, C_out, 1, 1) * x369
    assert out.shape == (1, C_out, H, W)
    assert jnp.allclose(out, ref, atol=1e-5, rtol=1e-5)

    print("KERNEL_OK")
</pallas_src>

<mosaic_0001>
module attributes {stable_mosaic.version = 11 : i64} {
  func.func @se_gate_kernel(%arg0: i32, %arg1: memref<1x64xf32, #tpu.memory_space<vmem>>, %arg2: memref<768x64xf32, #tpu.memory_space<vmem>>, %arg3: memref<768x1xf32, #tpu.memory_space<vmem>>, %arg4: memref<768x49xf32, #tpu.memory_space<vmem>>, %arg5: memref<768x49xf32, #tpu.memory_space<vmem>>) attributes {dimension_semantics = [#tpu.dimension_semantics<parallel>], iteration_bounds = array<i64: 2>, scalar_prefetch = 0 : i64, scratch_operands = 0 : i64, tpu.core_type = #tpu.core_type<tc>, window_params = [{pipeline_mode = #tpu.pipeline_mode<synchronous>, transform_indices = @transform_0, window_bounds = array<i64: 1, 64>}, {transform_indices = @transform_1, window_bounds = array<i64: 768, 64>}, {transform_indices = @transform_2, window_bounds = array<i64: 768, 1>}, {transform_indices = @transform_3, window_bounds = array<i64: 768, 49>}, {transform_indices = @transform_4, window_bounds = array<i64: 768, 49>}]} {
    %c0 = arith.constant 0 : index
    %c0_0 = arith.constant 0 : index
    %0 = vector.load %arg2[%c0, %c0_0] : memref<768x64xf32, #tpu.memory_space<vmem>>, vector<768x64xf32>
    %c0_1 = arith.constant 0 : index
    %c0_2 = arith.constant 0 : index
    %1 = vector.load %arg1[%c0_1, %c0_2] : memref<1x64xf32, #tpu.memory_space<vmem>>, vector<1x64xf32>
    %2 = vector.broadcast %1 : vector<1x64xf32> to vector<768x64xf32>
    %3 = arith.mulf %0, %2 : vector<768x64xf32>
    %cst = arith.constant dense<0.000000e+00> : vector<768xf32>
    %4 = vector.multi_reduction <add>, %3, %cst [1] : vector<768x64xf32> to vector<768xf32>
    %5 = vector.shape_cast %4 : vector<768xf32> to vector<768x1xf32>
    %c0_3 = arith.constant 0 : index
    %c0_4 = arith.constant 0 : index
    %6 = vector.load %arg3[%c0_3, %c0_4] : memref<768x1xf32, #tpu.memory_space<vmem>>, vector<768x1xf32>
    %7 = arith.addf %5, %6 : vector<768x1xf32>
    %8 = arith.negf %7 : vector<768x1xf32>
    %9 = math.exp %8 : vector<768x1xf32>
    %cst_5 = arith.constant 1.000000e+00 : f32
    %10 = vector.broadcast %cst_5 : f32 to vector<768x1xf32>
    %11 = arith.addf %10, %9 : vector<768x1xf32>
    %12 = arith.divf %10, %11 : vector<768x1xf32>
    %c0_6 = arith.constant 0 : index
    %c0_7 = arith.constant 0 : index
    %13 = vector.load %arg4[%c0_6, %c0_7] : memref<768x49xf32, #tpu.memory_space<vmem>>, vector<768x49xf32>
    %14 = vector.broadcast %12 : vector<768x1xf32> to vector<768x49xf32>
    %15 = arith.mulf %13, %14 : vector<768x49xf32>
    %c0_8 = arith.constant 0 : index
    %c0_9 = arith.constant 0 : index
    %16 = vector.load %arg5[%c0_8, %c0_9] : memref<768x49xf32, #tpu.memory_space<vmem>>, vector<768x49xf32>
    tpu.vector_store %arg5[%c0_8, %c0_9], %15 {strides = array<i32>} : memref<768x49xf32, #tpu.memory_space<vmem>>, vector<768x49xf32>,
    return
  }
  func.func @transform_0(%arg0: i32) -> (i32, i32) {
    %c0_i32 = arith.constant 0 : i32
    %c0_i32_0 = arith.constant 0 : i32
    %c0_i32_1 = arith.constant 0 : i32
    return %c0_i32, %c0_i32_0 : i32, i32
  }
  func.func @transform_1(%arg0: i32) -> (i32, i32) {
    %c0_i32 = arith.constant 0 : i32
    %c0_i32_0 = arith.constant 0 : i32
    return %arg0, %c0_i32 : i32, i32
  }
  func.func @transform_2(%arg0: i32) -> (i32, i32) {
    %c0_i32 = arith.constant 0 : i32
    %c0_i32_0 = arith.constant 0 : i32
    return %arg0, %c0_i32 : i32, i32
  }
  func.func @transform_3(%arg0: i32) -> (i32, i32) {
    %c0_i32 = arith.constant 0 : i32
    %c0_i32_0 = arith.constant 0 : i32
    return %arg0, %c0_i32 : i32, i32
  }
  func.func @transform_4(%arg0: i32) -> (i32, i32) {
    %c0_i32 = arith.constant 0 : i32
    %c0_i32_0 = arith.constant 0 : i32
    return %arg0, %c0_i32 : i32, i32
  }
}

</mosaic_0001>

<llo_original>
// kernel: tpu_custom_call.1
$region0: #{tpu_custom_call.1}
  #allocation0 [shape = 'u32[]', space=smem, size = 0x4, offset = 0x4, fixed_abs, tag = 'smem constant byte address 0x4 - core index']
  #allocation1 [shape = 'u32[144,128]{1,0:T(1,128)}', space=vmem, size = 0x12000, scoped, tag = 'internal scratch']
  %s0 = inlined_call_operand.vmem [shape: f32[1,64], index: 0, kind: input, shape index: {}]
  %s1 = inlined_call_operand.vmem [shape: f32[1536,64], index: 1, kind: input, shape index: {}]
  %s2 = inlined_call_operand.vmem [shape: f32[1536,1], index: 2, kind: input, shape index: {}]
  %s3 = inlined_call_operand.vmem [shape: f32[1536,49], index: 3, kind: input, shape index: {}]
  %s4 = inlined_call_operand.vmem [shape: f32[1536,49], index: 4, kind: output, shape index: {}]
  %s5 = sld [smem:[#allocation0]]
  $region49: #{tpu_custom_call.1} parent=0
    _
  %s7 = ssub.s32 1, %s5
  %s8 = scalar_select 0, %s7, %s5
  loop: start=0, step=1, limit=4
  $region2: #{tpu_custom_call.1} parent=0 // loop_pre_header
    _
  $region3: #{tpu_custom_call.1} parent=0 // loop_header
    %s10 = sphi 0, %s14
    %p11 = scmp.ge.s32.totalorder %s10, 4
    %s18 = sphi 0, %s18
    %s20 = sphi 0, %s18
    %s21 = sphi 0, %s20
    %s35 = sphi 0, %s21
    %s41 = sphi 0, %s43
    %s44 = sphi 0, %s41
    %s45 = sphi 0, %s44
    %s61 = sphi 0, %s45
    %s67 = sphi 0, %s69
    %s70 = sphi 0, %s67
    %s71 = sphi 0, %s70
    %s87 = sphi 0, %s71
    %s93 = sphi 0, %s95
    %s96 = sphi 0, %s93
    %s97 = sphi 0, %s96
    %s113 = sphi 0, %s97
    %s119 = sphi 0, %s121
    %s122 = sphi 0, %s119
    %s123 = sphi 0, %s122
    %s139 = sphi 0, %s123
  $region4: #{tpu_custom_call.1} parent=0 // loop_header_branch
    %13 = sbr.rel (%p11) target = $region8
  $region5: #{tpu_custom_call.1} parent=0 // loop_body
    %s15 = ssub.s32 %s10, 1
    %s16 = ssub.s32 %s10, 2
    %s17 = sadd.s32 %s10, 1
    %s19 = sadd.s32 %s18, 1
    %p22 = scmp.eq.s32.totalorder %s10, 1
    %p23 = scmp.ne.s32.totalorder %s18, %s20
    %p24 = scmp.eq.s32.totalorder %s10, 0
    %p25 = por %p23, %p24
    %p26 = scmp.ne.s32.totalorder %s18, %s20
    %p27 = scmp.eq.s32.totalorder %s15, 1
    %p28 = por %p26, %p27
    %p29 = scmp.ne.s32.totalorder %s20, %s21
    %p30 = scmp.eq.s32.totalorder %s15, 0
    %p31 = por %p29, %p30
    %p32 = scmp.ne.s32.totalorder %s20, %s21
    %p33 = scmp.eq.s32.totalorder %s16, 1
    %p34 = por %p32, %p33
    %p36 = scmp.ne.s32.totalorder %s21, %s35
    %p37 = scmp.eq.s32.totalorder %s16, 0
    %p38 = por %p36, %p37
    %s39 = ssub.s32 %s10, %s17
    %p40 = scmp.eq.s32.totalorder %s39, 0
    %s42 = sadd.s32 %s41, 1
    %s43 = scalar_select %p40, %s41, %s42
    %p46 = pneg %p40
    %p47 = scmp.eq.s32.totalorder %s10, 1
    %p48 = por %p46, %p47
    %p49 = scmp.ne.s32.totalorder %s41, %s44
    %p50 = scmp.eq.s32.totalorder %s10, 0
    %p51 = por %p49, %p50
    %p52 = scmp.ne.s32.totalorder %s41, %s44
    %p53 = scmp.eq.s32.totalorder %s15, 1
    %p54 = por %p52, %p53
    %p55 = scmp.ne.s32.totalorder %s44, %s45
    %p56 = scmp.eq.s32.totalorder %s15, 0
    %p57 = por %p55, %p56
    %p58 = scmp.ne.s32.totalorder %s44, %s45
    %p59 = scmp.eq.s32.totalorder %s16, 1
    %p60 = por %p58, %p59
    %p62 = scmp.ne.s32.totalorder %s45, %s61
    %p63 = scmp.eq.s32.totalorder %s16, 0
    %p64 = por %p62, %p63
    %s65 = ssub.s32 %s10, %s17
    %p66 = scmp.eq.s32.totalorder %s65, 0
    %s68 = sadd.s32 %s67, 1
    %s69 = scalar_select %p66, %s67, %s68
    %p72 = pneg %p66
    %p73 = scmp.eq.s32.totalorder %s10, 1
    %p74 = por %p72, %p73
    %p75 = scmp.ne.s32.totalorder %s67, %s70
    %p76 = scmp.eq.s32.totalorder %s10, 0
    %p77 = por %p75, %p76
    %p78 = scmp.ne.s32.totalorder %s67, %s70
    %p79 = scmp.eq.s32.totalorder %s15, 1
    %p80 = por %p78, %p79
    %p81 = scmp.ne.s32.totalorder %s70, %s71
    %p82 = scmp.eq.s32.totalorder %s15, 0
    %p83 = por %p81, %p82
    %p84 = scmp.ne.s32.totalorder %s70, %s71
    %p85 = scmp.eq.s32.totalorder %s16, 1
    %p86 = por %p84, %p85
    %p88 = scmp.ne.s32.totalorder %s71, %s87
    %p89 = scmp.eq.s32.totalorder %s16, 0
    %p90 = por %p88, %p89
    %s91 = ssub.s32 %s10, %s17
    %p92 = scmp.eq.s32.totalorder %s91, 0
    %s94 = sadd.s32 %s93, 1
    %s95 = scalar_select %p92, %s93, %s94
    %p98 = pneg %p92
    %p99 = scmp.eq.s32.totalorder %s10, 1
    %p100 = por %p98, %p99
    %p101 = scmp.ne.s32.totalorder %s93, %s96
    %p102 = scmp.eq.s32.totalorder %s10, 0
    %p103 = por %p101, %p102
    %p104 = scmp.ne.s32.totalorder %s93, %s96
    %p105 = scmp.eq.s32.totalorder %s15, 1
    %p106 = por %p104, %p105
    %p107 = scmp.ne.s32.totalorder %s96, %s97
    %p108 = scmp.eq.s32.totalorder %s15, 0
    %p109 = por %p107, %p108
    %p110 = scmp.ne.s32.totalorder %s96, %s97
    %p111 = scmp.eq.s32.totalorder %s16, 1
    %p112 = por %p110, %p111
    %p114 = scmp.ne.s32.totalorder %s97, %s113
    %p115 = scmp.eq.s32.totalorder %s16, 0
    %p116 = por %p114, %p115
    %s117 = ssub.s32 %s10, %s17
    %p118 = scmp.eq.s32.totalorder %s117, 0
    %s120 = sadd.s32 %s119, 1
    %s121 = scalar_select %p118, %s119, %s120
    %p124 = pneg %p118
    %p125 = scmp.eq.s32.totalorder %s10, 1
    %p126 = por %p124, %p125
    %p127 = scmp.ne.s32.totalorder %s119, %s122
    %p128 = scmp.eq.s32.totalorder %s10, 0
    %p129 = por %p127, %p128
    %p130 = scmp.ne.s32.totalorder %s119, %s122
    %p131 = scmp.eq.s32.totalorder %s15, 1
    %p132 = por %p130, %p131
    %p133 = scmp.ne.s32.totalorder %s122, %s123
    %p134 = scmp.eq.s32.totalorder %s15, 0
    %p135 = por %p133, %p134
    %p136 = scmp.ne.s32.totalorder %s122, %s123
    %p137 = scmp.eq.s32.totalorder %s16, 1
    %p138 = por %p136, %p137
    %p140 = scmp.ne.s32.totalorder %s123, %s139
    %p141 = scmp.eq.s32.totalorder %s16, 0
    %p142 = por %p140, %p141
    %p143 = scmp.le.s32.totalorder 1, %s10
    %p144 = scmp.lt.s32.totalorder %s10, 3
    %p145 = pnand %p143, %p144
    %p146 = pneg %p145
    // Predicated region
    $region9: #{tpu_custom_call.1} parent=5 // pred_check
      _
    $region10: #{tpu_custom_call.1} parent=5 // pred_check_branch
      %148 = sbr.rel (%p145) target = $region12
    $region11: #{tpu_custom_call.1} parent=5 // pred_region
      %s149 = ssub.s32 %s10, 1
      // Predicated region
      $region13: #{tpu_custom_call.1} parent=11 // pred_check
        %p150 = pneg %p31
      $region14: #{tpu_custom_call.1} parent=11 // pred_check_branch
        %152 = sbr.rel (%p150) target = $region16
      $region15: #{tpu_custom_call.1} parent=11 // pred_region
        _
      $region16: #{tpu_custom_call.1} parent=11 // pred_fallthru
        _
    $region12: #{tpu_custom_call.1} parent=5 // pred_fallthru
      _
    %p153 = scmp.lt.s32.totalorder %s10, 2
    // Predicated region
    $region17: #{tpu_custom_call.1} parent=5 // pred_check
      %p154 = pneg %p153
    $region18: #{tpu_custom_call.1} parent=5 // pred_check_branch
      %156 = sbr.rel (%p154) target = $region20
    $region19: #{tpu_custom_call.1} parent=5 // pred_region
      // Predicated region
      $region21: #{tpu_custom_call.1} parent=19 // pred_check
        %p157 = pneg %p51
      $region22: #{tpu_custom_call.1} parent=19 // pred_check_branch
        %159 = sbr.rel (%p157) target = $region24
      $region23: #{tpu_custom_call.1} parent=19 // pred_region
        %s160 = smul.u32 96, %s10
        %p161 = scmp.lt.s32.totalorder %s160, 191
        %s162 = scalar_select %p161, %s160, 191
        %s163 = smul.addr %s162, 8
        %s164 = scalar_lea.vmem %s1, %s163
        %s165 = smul.u32 96, %s10
      $region24: #{tpu_custom_call.1} parent=19 // pred_fallthru
        _
      // Predicated region
      $region25: #{tpu_custom_call.1} parent=19 // pred_check
        %p166 = pneg %p77
      $region26: #{tpu_custom_call.1} parent=19 // pred_check_branch
        %168 = sbr.rel (%p166) target = $region28
      $region27: #{tpu_custom_call.1} parent=19 // pred_region
        %s169 = smul.u32 96, %s10
        %p170 = scmp.lt.s32.totalorder %s169, 191
        %s171 = scalar_select %p170, %s169, 191
        %s172 = smul.addr %s171, 8
        %s173 = scalar_lea.vmem %s2, %s172
        %s174 = smul.u32 96, %s10
      $region28: #{tpu_custom_call.1} parent=19 // pred_fallthru
        _
      // Predicated region
      $region29: #{tpu_custom_call.1} parent=19 // pred_check
        %p175 = pneg %p103
      $region30: #{tpu_custom_call.1} parent=19 // pred_check_branch
        %177 = sbr.rel (%p175) target = $region32
      $region31: #{tpu_custom_call.1} parent=19 // pred_region
        %s178 = smul.u32 96, %s10
        %p179 = scmp.lt.s32.totalorder %s178, 191
        %s180 = scalar_select %p179, %s178, 191
        %s181 = smul.addr %s180, 8
        %s182 = scalar_lea.vmem %s3, %s181
        %s183 = smul.u32 96, %s10
      $region32: #{tpu_custom_call.1} parent=19 // pred_fallthru
        _
    $region20: #{tpu_custom_call.1} parent=5 // pred_fallthru
      _
    %p184 = scmp.le.s32.totalorder 1, %s10
    %p185 = scmp.lt.s32.totalorder %s10, 3
    %p186 = pnand %p184, %p185
    %p187 = pneg %p186
    // Predicated region
    $region33: #{tpu_custom_call.1} parent=5 // pred_check
      _
    $region34: #{tpu_custom_call.1} parent=5 // pred_check_branch
      %189 = sbr.rel (%p186) target = $region36
    $region35: #{tpu_custom_call.1} parent=5 // pred_region
      %s190 = ssub.s32 %s10, 1
      %p191 = pneg %p31
      %p192 = pneg %p28
      %s193 = smul.u32 96, %s15
      %p194 = scmp.lt.s32.totalorder %s193, 191
      %s195 = scalar_select %p194, %s193, 191
      %s196 = smul.addr %s195, 8
      %s197 = scalar_lea.vmem %s1, %s196
      %p198 = pneg %p57
      %p199 = pneg %p54
      %s200 = smul.u32 96, %s15
      %p201 = scmp.lt.s32.totalorder %s200, 191
      %s202 = scalar_select %p201, %s200, 191
      %s203 = smul.addr %s202, 8
      %s204 = scalar_lea.vmem %s2, %s203
      %p205 = pneg %p83
      %p206 = pneg %p80
      %s207 = smul.u32 96, %s15
      %p208 = scmp.lt.s32.totalorder %s207, 191
      %s209 = scalar_select %p208, %s207, 191
      %s210 = smul.addr %s209, 8
      %s211 = scalar_lea.vmem %s3, %s210
      %p212 = pneg %p109
      %p213 = pneg %p106
      %p214 = pneg %p135
      %p215 = pneg %p132
      %s216 = smul.u32 96, %s15
      %p217 = scmp.lt.s32.totalorder %s216, 191
      %s218 = scalar_select %p217, %s216, 191
      %s219 = smul.addr %s218, 8
      %s220 = scalar_lea.vmem %s4, %s219
      %s221 = smul.u32 96, %s15
      %p222 = scmp.lt.s32.totalorder %s221, 191
      %s223 = scalar_select %p222, %s221, 191
      %s224 = smul.addr %s223, 8
      %s225 = scalar_lea.vmem %s1, %s224
      %s226 = smul.u32 96, %s15
      %s227 = smul.u32 96, %s15
      %p228 = scmp.lt.s32.totalorder %s227, 191
      %s229 = scalar_select %p228, %s227, 191
      %s230 = smul.addr %s229, 8
      %s231 = scalar_lea.vmem %s2, %s230
      %s232 = smul.u32 96, %s15
      %s233 = smul.u32 96, %s15
      %p234 = scmp.lt.s32.totalorder %s233, 191
      %s235 = scalar_select %p234, %s233, 191
      %s236 = smul.addr %s235, 8
      %s237 = scalar_lea.vmem %s3, %s236
      %s238 = smul.u32 96, %s15
      %s239 = smul.u32 96, %s15
      %p240 = scmp.lt.s32.totalorder %s239, 191
      %s241 = scalar_select %p240, %s239, 191
      %s242 = smul.addr %s241, 8
      %s243 = scalar_lea.vmem %s4, %s242
      %s244 = smul.u32 96, %s15
      %v245 = vld [vmem:[%s225] sm:$0xff]
      %v246 = vld [vmem:[%s225 + $0x8] sm:$0xff]
      %v247 = vld [vmem:[%s225 + $0x10] sm:$0xff]
      %v248 = vld [vmem:[%s225 + $0x18] sm:$0xff]
      %v249 = vld [vmem:[%s225 + $0x20] sm:$0xff]
      %v250 = vld [vmem:[%s225 + $0x28] sm:$0xff]
      %v251 = vld [vmem:[%s225 + $0x30] sm:$0xff]
      %v252 = vld [vmem:[%s225 + $0x38] sm:$0xff]
      %v253 = vld [vmem:[%s225 + $0x40] sm:$0xff]
      %v254 = vld [vmem:[%s225 + $0x48] sm:$0xff]
      %v255 = vld [vmem:[%s225 + $0x50] sm:$0xff]
      %v256 = vld [vmem:[%s225 + $0x58] sm:$0xff]
      %v257 = vld [vmem:[%s225 + $0x60] sm:$0xff]
      %v258 = vld [vmem:[%s225 + $0x68] sm:$0xff]
      %v259 = vld [vmem:[%s225 + $0x70] sm:$0xff]
      %v260 = vld [vmem:[%s225 + $0x78] sm:$0xff]
      %v261 = vld [vmem:[%s225 + $0x80] sm:$0xff]
      %v262 = vld [vmem:[%s225 + $0x88] sm:$0xff]
      %v263 = vld [vmem:[%s225 + $0x90] sm:$0xff]
      %v264 = vld [vmem:[%s225 + $0x98] sm:$0xff]
      %v265 = vld [vmem:[%s225 + $0xa0] sm:$0xff]
      %v266 = vld [vmem:[%s225 + $0xa8] sm:$0xff]
      %v267 = vld [vmem:[%s225 + $0xb0] sm:$0xff]
      %v268 = vld [vmem:[%s225 + $0xb8] sm:$0xff]
      %v269 = vld [vmem:[%s225 + $0xc0] sm:$0xff]
      %v270 = vld [vmem:[%s225 + $0xc8] sm:$0xff]
      %v271 = vld [vmem:[%s225 + $0xd0] sm:$0xff]
      %v272 = vld [vmem:[%s225 + $0xd8] sm:$0xff]
      %v273 = vld [vmem:[%s225 + $0xe0] sm:$0xff]
      %v274 = vld [vmem:[%s225 + $0xe8] sm:$0xff]
      %v275 = vld [vmem:[%s225 + $0xf0] sm:$0xff]
      %v276 = vld [vmem:[%s225 + $0xf8] sm:$0xff]
      %v277 = vld [vmem:[%s225 + $0x100] sm:$0xff]
      %v278 = vld [vmem:[%s225 + $0x108] sm:$0xff]
      %v279 = vld [vmem:[%s225 + $0x110] sm:$0xff]
      %v280 = vld [vmem:[%s225 + $0x118] sm:$0xff]
      %v281 = vld [vmem:[%s225 + $0x120] sm:$0xff]
      %v282 = vld [vmem:[%s225 + $0x128] sm:$0xff]
      %v283 = vld [vmem:[%s225 + $0x130] sm:$0xff]
      %v284 = vld [vmem:[%s225 + $0x138] sm:$0xff]
      %v285 = vld [vmem:[%s225 + $0x140] sm:$0xff]
      %v286 = vld [vmem:[%s225 + $0x148] sm:$0xff]
      %v287 = vld [vmem:[%s225 + $0x150] sm:$0xff]
      %v288 = vld [vmem:[%s225 + $0x158] sm:$0xff]
      %v289 = vld [vmem:[%s225 + $0x160] sm:$0xff]
      %v290 = vld [vmem:[%s225 + $0x168] sm:$0xff]
      %v291 = vld [vmem:[%s225 + $0x170] sm:$0xff]
      %v292 = vld [vmem:[%s225 + $0x178] sm:$0xff]
      %v293 = vld [vmem:[%s225 + $0x180] sm:$0xff]
      %v294 = vld [vmem:[%s225 + $0x188] sm:$0xff]
      %v295 = vld [vmem:[%s225 + $0x190] sm:$0xff]
      %v296 = vld [vmem:[%s225 + $0x198] sm:$0xff]
      %v297 = vld [vmem:[%s225 + $0x1a0] sm:$0xff]
      %v298 = vld [vmem:[%s225 + $0x1a8] sm:$0xff]
      %v299 = vld [vmem:[%s225 + $0x1b0] sm:$0xff]
      %v300 = vld [vmem:[%s225 + $0x1b8] sm:$0xff]
      %v301 = vld [vmem:[%s225 + $0x1c0] sm:$0xff]
      %v302 = vld [vmem:[%s225 + $0x1c8] sm:$0xff]
      %v303 = vld [vmem:[%s225 + $0x1d0] sm:$0xff]
      %v304 = vld [vmem:[%s225 + $0x1d8] sm:$0xff]
      %v305 = vld [vmem:[%s225 + $0x1e0] sm:$0xff]
      %v306 = vld [vmem:[%s225 + $0x1e8] sm:$0xff]
      %v307 = vld [vmem:[%s225 + $0x1f0] sm:$0xff]
      %v308 = vld [vmem:[%s225 + $0x1f8] sm:$0xff]
      %v309 = vld [vmem:[%s225 + $0x200] sm:$0xff]
      %v310 = vld [vmem:[%s225 + $0x208] sm:$0xff]
      %v311 = vld [vmem:[%s225 + $0x210] sm:$0xff]
      %v312 = vld [vmem:[%s225 + $0x218] sm:$0xff]
      %v313 = vld [vmem:[%s225 + $0x220] sm:$0xff]
      %v314 = vld [vmem:[%s225 + $0x228] sm:$0xff]
      %v315 = vld [vmem:[%s225 + $0x230] sm:$0xff]
      %v316 = vld [vmem:[%s225 + $0x238] sm:$0xff]
      %v317 = vld [vmem:[%s225 + $0x240] sm:$0xff]
      %v318 = vld [vmem:[%s225 + $0x248] sm:$0xff]
      %v319 = vld [vmem:[%s225 + $0x250] sm:$0xff]
      %v320 = vld [vmem:[%s225 + $0x258] sm:$0xff]
      %v321 = vld [vmem:[%s225 + $0x260] sm:$0xff]
      %v322 = vld [vmem:[%s225 + $0x268] sm:$0xff]
      %v323 = vld [vmem:[%s225 + $0x270] sm:$0xff]
      %v324 = vld [vmem:[%s225 + $0x278] sm:$0xff]
      %v325 = vld [vmem:[%s225 + $0x280] sm:$0xff]
      %v326 = vld [vmem:[%s225 + $0x288] sm:$0xff]
      %v327 = vld [vmem:[%s225 + $0x290] sm:$0xff]
      %v328 = vld [vmem:[%s225 + $0x298] sm:$0xff]
      %v329 = vld [vmem:[%s225 + $0x2a0] sm:$0xff]
      %v330 = vld [vmem:[%s225 + $0x2a8] sm:$0xff]
      %v331 = vld [vmem:[%s225 + $0x2b0] sm:$0xff]
      %v332 = vld [vmem:[%s225 + $0x2b8] sm:$0xff]
      %v333 = vld [vmem:[%s225 + $0x2c0] sm:$0xff]
      %v334 = vld [vmem:[%s225 + $0x2c8] sm:$0xff]
      %v335 = vld [vmem:[%s225 + $0x2d0] sm:$0xff]
      %v336 = vld [vmem:[%s225 + $0x2d8] sm:$0xff]
      %v337 = vld [vmem:[%s225 + $0x2e0] sm:$0xff]
      %v338 = vld [vmem:[%s225 + $0x2e8] sm:$0xff]
      %v339 = vld [vmem:[%s225 + $0x2f0] sm:$0xff]
      %v340 = vld [vmem:[%s225 + $0x2f8] sm:$0xff]
      %v341 = vld [vmem:[%s0] sm:$0x1]
      %v343 = vlaneseq
      %v344 = vshrl.u32 %v343, 7
      %v345 = vsub.s32 0, %v344
      %v346 = vrot.slane %v341, %v345
      %v348 = vmul.f32 %v245, %v346
      %v349 = vmul.f32 %v246, %v346
      %v350 = vmul.f32 %v247, %v346
      %v351 = vmul.f32 %v248, %v346
      %v352 = vmul.f32 %v249, %v346
      %v353 = vmul.f32 %v250, %v346
      %v354 = vmul.f32 %v251, %v346
      %v355 = vmul.f32 %v252, %v346
      %v356 = vmul.f32 %v253, %v346
      %v357 = vmul.f32 %v254, %v346
      %v358 = vmul.f32 %v255, %v346
      %v359 = vmul.f32 %v256, %v346
      %v360 = vmul.f32 %v257, %v346
      %v361 = vmul.f32 %v258, %v346
      %v362 = vmul.f32 %v259, %v346
      %v363 = vmul.f32 %v260, %v346
      %v364 = vmul.f32 %v261, %v346
      %v365 = vmul.f32 %v262, %v346
      %v366 = vmul.f32 %v263, %v346
      %v367 = vmul.f32 %v264, %v346
      %v368 = vmul.f32 %v265, %v346
      %v369 = vmul.f32 %v266, %v346
      %v370 = vmul.f32 %v267, %v346
      %v371 = vmul.f32 %v268, %v346
      %v372 = vmul.f32 %v269, %v346
      %v373 = vmul.f32 %v270, %v346
      %v374 = vmul.f32 %v271, %v346
      %v375 = vmul.f32 %v272, %v346
      %v376 = vmul.f32 %v273, %v346
      %v377 = vmul.f32 %v274, %v346
      %v378 = vmul.f32 %v275, %v346
      %v379 = vmul.f32 %v276, %v346
      %v380 = vmul.f32 %v277, %v346
      %v381 = vmul.f32 %v278, %v346
      %v382 = vmul.f32 %v279, %v346
      %v383 = vmul.f32 %v280, %v346
      %v384 = vmul.f32 %v281, %v346
      %v385 = vmul.f32 %v282, %v346
      %v386 = vmul.f32 %v283, %v346
      %v387 = vmul.f32 %v284, %v346
      %v388 = vmul.f32 %v285, %v346
      %v389 = vmul.f32 %v286, %v346
      %v390 = vmul.f32 %v287, %v346
      %v391 = vmul.f32 %v288, %v346
      %v392 = vmul.f32 %v289, %v346
      %v393 = vmul.f32 %v290, %v346
      %v394 = vmul.f32 %v291, %v346
      %v395 = vmul.f32 %v292, %v346
      %v396 = vmul.f32 %v293, %v346
      %v397 = vmul.f32 %v294, %v346
      %v398 = vmul.f32 %v295, %v346
      %v399 = vmul.f32 %v296, %v346
      %v400 = vmul.f32 %v297, %v346
      %v401 = vmul.f32 %v298, %v346
      %v402 = vmul.f32 %v299, %v346
      %v403 = vmul.f32 %v300, %v346
      %v404 = vmul.f32 %v301, %v346
      %v405 = vmul.f32 %v302, %v346
      %v406 = vmul.f32 %v303, %v346
      %v407 = vmul.f32 %v304, %v346
      %v408 = vmul.f32 %v305, %v346
      %v409 = vmul.f32 %v306, %v346
      %v410 = vmul.f32 %v307, %v346
      %v411 = vmul.f32 %v308, %v346
      %v412 = vmul.f32 %v309, %v346
      %v413 = vmul.f32 %v310, %v346
      %v414 = vmul.f32 %v311, %v346
      %v415 = vmul.f32 %v312, %v346
      %v416 = vmul.f32 %v313, %v346
      %v417 = vmul.f32 %v314, %v346
      %v418 = vmul.f32 %v315, %v346
      %v419 = vmul.f32 %v316, %v346
      %v420 = vmul.f32 %v317, %v346
      %v421 = vmul.f32 %v318, %v346
      %v422 = vmul.f32 %v319, %v346
      %v423 = vmul.f32 %v320, %v346
      %v424 = vmul.f32 %v321, %v346
      %v425 = vmul.f32 %v322, %v346
      %v426 = vmul.f32 %v323, %v346
      %v427 = vmul.f32 %v324, %v346
      %v428 = vmul.f32 %v325, %v346
      %v429 = vmul.f32 %v326, %v346
      %v430 = vmul.f32 %v327, %v346
      %v431 = vmul.f32 %v328, %v346
      %v432 = vmul.f32 %v329, %v346
      %v433 = vmul.f32 %v330, %v346
      %v434 = vmul.f32 %v331, %v346
      %v435 = vmul.f32 %v332, %v346
      %v436 = vmul.f32 %v333, %v346
      %v437 = vmul.f32 %v334, %v346
      %v438 = vmul.f32 %v335, %v346
      %v439 = vmul.f32 %v336, %v346
      %v440 = vmul.f32 %v337, %v346
      %v441 = vmul.f32 %v338, %v346
      %v442 = vmul.f32 %v339, %v346
      %v443 = vmul.f32 %v340, %v346
      %vm444 = vcmask 523264
      %v445 = vsel %vm444, %v348, 0.0
      %446 = vadd.xlane.f32.xlu0 %v445
      %v447 = vpop.xlane.xlu0 %446
      %v448 = vsel %vm444, %v349, 0.0
      %449 = vadd.xlane.f32.xlu0 %v448
      %v450 = vpop.xlane.xlu0 %449
      %v451 = vsel %vm444, %v350, 0.0
      %452 = vadd.xlane.f32.xlu0 %v451
      %v453 = vpop.xlane.xlu0 %452
      %v454 = vsel %vm444, %v351, 0.0
      %455 = vadd.xlane.f32.xlu0 %v454
      %v456 = vpop.xlane.xlu0 %455
      %v457 = vsel %vm444, %v352, 0.0
      %458 = vadd.xlane.f32.xlu0 %v457
      %v459 = vpop.xlane.xlu0 %458
      %v460 = vsel %vm444, %v353, 0.0
      %461 = vadd.xlane.f32.xlu0 %v460
      %v462 = vpop.xlane.xlu0 %461
      %v463 = vsel %vm444, %v354, 0.0
      %464 = vadd.xlane.f32.xlu0 %v463
      %v465 = vpop.xlane.xlu0 %464
      %v466 = vsel %vm444, %v355, 0.0
      %467 = vadd.xlane.f32.xlu0 %v466
      %v468 = vpop.xlane.xlu0 %467
      %v469 = vsel %vm444, %v356, 0.0
      %470 = vadd.xlane.f32.xlu0 %v469
      %v471 = vpop.xlane.xlu0 %470
      %v472 = vsel %vm444, %v357, 0.0
      %473 = vadd.xlane.f32.xlu0 %v472
      %v474 = vpop.xlane.xlu0 %473
      %v475 = vsel %vm444, %v358, 0.0
      %476 = vadd.xlane.f32.xlu0 %v475
      %v477 = vpop.xlane.xlu0 %476
      %v478 = vsel %vm444, %v359, 0.0
      %479 = vadd.xlane.f32.xlu0 %v478
      %v480 = vpop.xlane.xlu0 %479
      %v481 = vsel %vm444, %v360, 0.0
      %482 = vadd.xlane.f32.xlu0 %v481
      %v483 = vpop.xlane.xlu0 %482
      %v484 = vsel %vm444, %v361, 0.0
      %485 = vadd.xlane.f32.xlu0 %v484
      %v486 = vpop.xlane.xlu0 %485
      %v487 = vsel %vm444, %v362, 0.0
      %488 = vadd.xlane.f32.xlu0 %v487
      %v489 = vpop.xlane.xlu0 %488
      %v490 = vsel %vm444, %v363, 0.0
      %491 = vadd.xlane.f32.xlu0 %v490
      %v492 = vpop.xlane.xlu0 %491
      %v493 = vsel %vm444, %v364, 0.0
      %494 = vadd.xlane.f32.xlu0 %v493
      %v495 = vpop.xlane.xlu0 %494
      %v496 = vsel %vm444, %v365, 0.0
      %497 = vadd.xlane.f32.xlu0 %v496
      %v498 = vpop.xlane.xlu0 %497
      %v499 = vsel %vm444, %v366, 0.0
      %500 = vadd.xlane.f32.xlu0 %v499
      %v501 = vpop.xlane.xlu0 %500
      %v502 = vsel %vm444, %v367, 0.0
      %503 = vadd.xlane.f32.xlu0 %v502
      %v504 = vpop.xlane.xlu0 %503
      %v505 = vsel %vm444, %v368, 0.0
      %506 = vadd.xlane.f32.xlu0 %v505
      %v507 = vpop.xlane.xlu0 %506
      %v508 = vsel %vm444, %v369, 0.0
      %509 = vadd.xlane.f32.xlu0 %v508
      %v510 = vpop.xlane.xlu0 %509
      %v511 = vsel %vm444, %v370, 0.0
      %512 = vadd.xlane.f32.xlu0 %v511
      %v513 = vpop.xlane.xlu0 %512
      %v514 = vsel %vm444, %v371, 0.0
      %515 = vadd.xlane.f32.xlu0 %v514
      %v516 = vpop.xlane.xlu0 %515
      %v517 = vsel %vm444, %v372, 0.0
      %518 = vadd.xlane.f32.xlu0 %v517
      %v519 = vpop.xlane.xlu0 %518
      %v520 = vsel %vm444, %v373, 0.0
      %521 = vadd.xlane.f32.xlu0 %v520
      %v522 = vpop.xlane.xlu0 %521
      %v523 = vsel %vm444, %v374, 0.0
      %524 = vadd.xlane.f32.xlu0 %v523
      %v525 = vpop.xlane.xlu0 %524
      %v526 = vsel %vm444, %v375, 0.0
      %527 = vadd.xlane.f32.xlu0 %v526
      %v528 = vpop.xlane.xlu0 %527
      %v529 = vsel %vm444, %v376, 0.0
      %530 = vadd.xlane.f32.xlu0 %v529
      %v531 = vpop.xlane.xlu0 %530
      %v532 = vsel %vm444, %v377, 0.0
      %533 = vadd.xlane.f32.xlu0 %v532
      %v534 = vpop.xlane.xlu0 %533
      %v535 = vsel %vm444, %v378, 0.0
      %536 = vadd.xlane.f32.xlu0 %v535
      %v537 = vpop.xlane.xlu0 %536
      %v538 = vsel %vm444, %v379, 0.0
      %539 = vadd.xlane.f32.xlu0 %v538
      %v540 = vpop.xlane.xlu0 %539
      %v541 = vsel %vm444, %v380, 0.0
      %542 = vadd.xlane.f32.xlu0 %v541
      %v543 = vpop.xlane.xlu0 %542
      %v544 = vsel %vm444, %v381, 0.0
      %545 = vadd.xlane.f32.xlu0 %v544
      %v546 = vpop.xlane.xlu0 %545
      %v547 = vsel %vm444, %v382, 0.0
      %548 = vadd.xlane.f32.xlu0 %v547
      %v549 = vpop.xlane.xlu0 %548
      %v550 = vsel %vm444, %v383, 0.0
      %551 = vadd.xlane.f32.xlu0 %v550
      %v552 = vpop.xlane.xlu0 %551
      %v553 = vsel %vm444, %v384, 0.0
      %554 = vadd.xlane.f32.xlu0 %v553
      %v555 = vpop.xlane.xlu0 %554
      %v556 = vsel %vm444, %v385, 0.0
      %557 = vadd.xlane.f32.xlu0 %v556
      %v558 = vpop.xlane.xlu0 %557
      %v559 = vsel %vm444, %v386, 0.0
      %560 = vadd.xlane.f32.xlu0 %v559
      %v561 = vpop.xlane.xlu0 %560
      %v562 = vsel %vm444, %v387, 0.0
      %563 = vadd.xlane.f32.xlu0 %v562
      %v564 = vpop.xlane.xlu0 %563
      %v565 = vsel %vm444, %v388, 0.0
      %566 = vadd.xlane.f32.xlu0 %v565
      %v567 = vpop.xlane.xlu0 %566
      %v568 = vsel %vm444, %v389, 0.0
      %569 = vadd.xlane.f32.xlu0 %v568
      %v570 = vpop.xlane.xlu0 %569
      %v571 = vsel %vm444, %v390, 0.0
      %572 = vadd.xlane.f32.xlu0 %v571
      %v573 = vpop.xlane.xlu0 %572
      %v574 = vsel %vm444, %v391, 0.0
      %575 = vadd.xlane.f32.xlu0 %v574
      %v576 = vpop.xlane.xlu0 %575
      %v577 = vsel %vm444, %v392, 0.0
      %578 = vadd.xlane.f32.xlu0 %v577
      %v579 = vpop.xlane.xlu0 %578
      %v580 = vsel %vm444, %v393, 0.0
      %581 = vadd.xlane.f32.xlu0 %v580
      %v582 = vpop.xlane.xlu0 %581
      %v583 = vsel %vm444, %v394, 0.0
      %584 = vadd.xlane.f32.xlu0 %v583
      %v585 = vpop.xlane.xlu0 %584
      %v586 = vsel %vm444, %v395, 0.0
      %587 = vadd.xlane.f32.xlu0 %v586
      %v588 = vpop.xlane.xlu0 %587
      %v589 = vsel %vm444, %v396, 0.0
      %590 = vadd.xlane.f32.xlu0 %v589
      %v591 = vpop.xlane.xlu0 %590
      %v592 = vsel %vm444, %v397, 0.0
      %593 = vadd.xlane.f32.xlu0 %v592
      %v594 = vpop.xlane.xlu0 %593
      %v595 = vsel %vm444, %v398, 0.0
      %596 = vadd.xlane.f32.xlu0 %v595
      %v597 = vpop.xlane.xlu0 %596
      %v598 = vsel %vm444, %v399, 0.0
      %599 = vadd.xlane.f32.xlu0 %v598
      %v600 = vpop.xlane.xlu0 %599
      %v601 = vsel %vm444, %v400, 0.0
      %602 = vadd.xlane.f32.xlu0 %v601
      %v603 = vpop.xlane.xlu0 %602
      %v604 = vsel %vm444, %v401, 0.0
      %605 = vadd.xlane.f32.xlu0 %v604
      %v606 = vpop.xlane.xlu0 %605
      %v607 = vsel %vm444, %v402, 0.0
      %608 = vadd.xlane.f32.xlu0 %v607
      %v609 = vpop.xlane.xlu0 %608
      %v610 = vsel %vm444, %v403, 0.0
      %611 = vadd.xlane.f32.xlu0 %v610
      %v612 = vpop.xlane.xlu0 %611
      %v613 = vsel %vm444, %v404, 0.0
      %614 = vadd.xlane.f32.xlu0 %v613
      %v615 = vpop.xlane.xlu0 %614
      %v616 = vsel %vm444, %v405, 0.0
      %617 = vadd.xlane.f32.xlu0 %v616
      %v618 = vpop.xlane.xlu0 %617
      %v619 = vsel %vm444, %v406, 0.0
      %620 = vadd.xlane.f32.xlu0 %v619
      %v621 = vpop.xlane.xlu0 %620
      %v622 = vsel %vm444, %v407, 0.0
      %623 = vadd.xlane.f32.xlu0 %v622
      %v624 = vpop.xlane.xlu0 %623
      %v625 = vsel %vm444, %v408, 0.0
      %626 = vadd.xlane.f32.xlu0 %v625
      %v627 = vpop.xlane.xlu0 %626
      %v628 = vsel %vm444, %v409, 0.0
      %629 = vadd.xlane.f32.xlu0 %v628
      %v630 = vpop.xlane.xlu0 %629
      %v631 = vsel %vm444, %v410, 0.0
      %632 = vadd.xlane.f32.xlu0 %v631
      %v633 = vpop.xlane.xlu0 %632
      %v634 = vsel %vm444, %v411, 0.0
      %635 = vadd.xlane.f32.xlu0 %v634
      %v636 = vpop.xlane.xlu0 %635
      %v637 = vsel %vm444, %v412, 0.0
      %638 = vadd.xlane.f32.xlu0 %v637
      %v639 = vpop.xlane.xlu0 %638
      %v640 = vsel %vm444, %v413, 0.0
      %641 = vadd.xlane.f32.xlu0 %v640
      %v642 = vpop.xlane.xlu0 %641
      %v643 = vsel %vm444, %v414, 0.0
      %644 = vadd.xlane.f32.xlu0 %v643
      %v645 = vpop.xlane.xlu0 %644
      %v646 = vsel %vm444, %v415, 0.0
      %647 = vadd.xlane.f32.xlu0 %v646
      %v648 = vpop.xlane.xlu0 %647
      %v649 = vsel %vm444, %v416, 0.0
      %650 = vadd.xlane.f32.xlu0 %v649
      %v651 = vpop.xlane.xlu0 %650
      %v652 = vsel %vm444, %v417, 0.0
      %653 = vadd.xlane.f32.xlu0 %v652
      %v654 = vpop.xlane.xlu0 %653
      %v655 = vsel %vm444, %v418, 0.0
      %656 = vadd.xlane.f32.xlu0 %v655
      %v657 = vpop.xlane.xlu0 %656
      %v658 = vsel %vm444, %v419, 0.0
      %659 = vadd.xlane.f32.xlu0 %v658
      %v660 = vpop.xlane.xlu0 %659
      %v661 = vsel %vm444, %v420, 0.0
      %662 = vadd.xlane.f32.xlu0 %v661
      %v663 = vpop.xlane.xlu0 %662
      %v664 = vsel %vm444, %v421, 0.0
      %665 = vadd.xlane.f32.xlu0 %v664
      %v666 = vpop.xlane.xlu0 %665
      %v667 = vsel %vm444, %v422, 0.0
      %668 = vadd.xlane.f32.xlu0 %v667
      %v669 = vpop.xlane.xlu0 %668
      %v670 = vsel %vm444, %v423, 0.0
      %671 = vadd.xlane.f32.xlu0 %v670
      %v672 = vpop.xlane.xlu0 %671
      %v673 = vsel %vm444, %v424, 0.0
      %674 = vadd.xlane.f32.xlu0 %v673
      %v675 = vpop.xlane.xlu0 %674
      %v676 = vsel %vm444, %v425, 0.0
      %677 = vadd.xlane.f32.xlu0 %v676
      %v678 = vpop.xlane.xlu0 %677
      %v679 = vsel %vm444, %v426, 0.0
      %680 = vadd.xlane.f32.xlu0 %v679
      %v681 = vpop.xlane.xlu0 %680
      %v682 = vsel %vm444, %v427, 0.0
      %683 = vadd.xlane.f32.xlu0 %v682
      %v684 = vpop.xlane.xlu0 %683
      %v685 = vsel %vm444, %v428, 0.0
      %686 = vadd.xlane.f32.xlu0 %v685
      %v687 = vpop.xlane.xlu0 %686
      %v688 = vsel %vm444, %v429, 0.0
      %689 = vadd.xlane.f32.xlu0 %v688
      %v690 = vpop.xlane.xlu0 %689
      %v691 = vsel %vm444, %v430, 0.0
      %692 = vadd.xlane.f32.xlu0 %v691
      %v693 = vpop.xlane.xlu0 %692
      %v694 = vsel %vm444, %v431, 0.0
      %695 = vadd.xlane.f32.xlu0 %v694
      %v696 = vpop.xlane.xlu0 %695
      %v697 = vsel %vm444, %v432, 0.0
      %698 = vadd.xlane.f32.xlu0 %v697
      %v699 = vpop.xlane.xlu0 %698
      %v700 = vsel %vm444, %v433, 0.0
      %701 = vadd.xlane.f32.xlu0 %v700
      %v702 = vpop.xlane.xlu0 %701
      %v703 = vsel %vm444, %v434, 0.0
      %704 = vadd.xlane.f32.xlu0 %v703
      %v705 = vpop.xlane.xlu0 %704
      %v706 = vsel %vm444, %v435, 0.0
      %707 = vadd.xlane.f32.xlu0 %v706
      %v708 = vpop.xlane.xlu0 %707
      %v709 = vsel %vm444, %v436, 0.0
      %710 = vadd.xlane.f32.xlu0 %v709
      %v711 = vpop.xlane.xlu0 %710
      %v712 = vsel %vm444, %v437, 0.0
      %713 = vadd.xlane.f32.xlu0 %v712
      %v714 = vpop.xlane.xlu0 %713
      %v715 = vsel %vm444, %v438, 0.0
      %716 = vadd.xlane.f32.xlu0 %v715
      %v717 = vpop.xlane.xlu0 %716
      %v718 = vsel %vm444, %v439, 0.0
      %719 = vadd.xlane.f32.xlu0 %v718
      %v720 = vpop.xlane.xlu0 %719
      %v721 = vsel %vm444, %v440, 0.0
      %722 = vadd.xlane.f32.xlu0 %v721
      %v723 = vpop.xlane.xlu0 %722
      %v724 = vsel %vm444, %v441, 0.0
      %725 = vadd.xlane.f32.xlu0 %v724
      %v726 = vpop.xlane.xlu0 %725
      %v727 = vsel %vm444, %v442, 0.0
      %728 = vadd.xlane.f32.xlu0 %v727
      %v729 = vpop.xlane.xlu0 %728
      %v730 = vsel %vm444, %v443, 0.0
      %731 = vadd.xlane.f32.xlu0 %v730
      %v732 = vpop.xlane.xlu0 %731
      %v733 = vld [vmem:[%s231] sm:$0xff]
      %v734 = vld [vmem:[%s231 + $0x8] sm:$0xff]
      %v735 = vld [vmem:[%s231 + $0x10] sm:$0xff]
      %v736 = vld [vmem:[%s231 + $0x18] sm:$0xff]
      %v737 = vld [vmem:[%s231 + $0x20] sm:$0xff]
      %v738 = vld [vmem:[%s231 + $0x28] sm:$0xff]
      %v739 = vld [vmem:[%s231 + $0x30] sm:$0xff]
      %v740 = vld [vmem:[%s231 + $0x38] sm:$0xff]
      %v741 = vld [vmem:[%s231 + $0x40] sm:$0xff]
      %v742 = vld [vmem:[%s231 + $0x48] sm:$0xff]
      %v743 = vld [vmem:[%s231 + $0x50] sm:$0xff]
      %v744 = vld [vmem:[%s231 + $0x58] sm:$0xff]
      %v745 = vld [vmem:[%s231 + $0x60] sm:$0xff]
      %v746 = vld [vmem:[%s231 + $0x68] sm:$0xff]
      %v747 = vld [vmem:[%s231 + $0x70] sm:$0xff]
      %v748 = vld [vmem:[%s231 + $0x78] sm:$0xff]
      %v749 = vld [vmem:[%s231 + $0x80] sm:$0xff]
      %v750 = vld [vmem:[%s231 + $0x88] sm:$0xff]
      %v751 = vld [vmem:[%s231 + $0x90] sm:$0xff]
      %v752 = vld [vmem:[%s231 + $0x98] sm:$0xff]
      %v753 = vld [vmem:[%s231 + $0xa0] sm:$0xff]
      %v754 = vld [vmem:[%s231 + $0xa8] sm:$0xff]
      %v755 = vld [vmem:[%s231 + $0xb0] sm:$0xff]
      %v756 = vld [vmem:[%s231 + $0xb8] sm:$0xff]
      %v757 = vld [vmem:[%s231 + $0xc0] sm:$0xff]
      %v758 = vld [vmem:[%s231 + $0xc8] sm:$0xff]
      %v759 = vld [vmem:[%s231 + $0xd0] sm:$0xff]
      %v760 = vld [vmem:[%s231 + $0xd8] sm:$0xff]
      %v761 = vld [vmem:[%s231 + $0xe0] sm:$0xff]
      %v762 = vld [vmem:[%s231 + $0xe8] sm:$0xff]
      %v763 = vld [vmem:[%s231 + $0xf0] sm:$0xff]
      %v764 = vld [vmem:[%s231 + $0xf8] sm:$0xff]
      %v765 = vld [vmem:[%s231 + $0x100] sm:$0xff]
      %v766 = vld [vmem:[%s231 + $0x108] sm:$0xff]
      %v767 = vld [vmem:[%s231 + $0x110] sm:$0xff]
      %v768 = vld [vmem:[%s231 + $0x118] sm:$0xff]
      %v769 = vld [vmem:[%s231 + $0x120] sm:$0xff]
      %v770 = vld [vmem:[%s231 + $0x128] sm:$0xff]
      %v771 = vld [vmem:[%s231 + $0x130] sm:$0xff]
      %v772 = vld [vmem:[%s231 + $0x138] sm:$0xff]
      %v773 = vld [vmem:[%s231 + $0x140] sm:$0xff]
      %v774 = vld [vmem:[%s231 + $0x148] sm:$0xff]
      %v775 = vld [vmem:[%s231 + $0x150] sm:$0xff]
      %v776 = vld [vmem:[%s231 + $0x158] sm:$0xff]
      %v777 = vld [vmem:[%s231 + $0x160] sm:$0xff]
      %v778 = vld [vmem:[%s231 + $0x168] sm:$0xff]
      %v779 = vld [vmem:[%s231 + $0x170] sm:$0xff]
      %v780 = vld [vmem:[%s231 + $0x178] sm:$0xff]
      %v781 = vld [vmem:[%s231 + $0x180] sm:$0xff]
      %v782 = vld [vmem:[%s231 + $0x188] sm:$0xff]
      %v783 = vld [vmem:[%s231 + $0x190] sm:$0xff]
      %v784 = vld [vmem:[%s231 + $0x198] sm:$0xff]
      %v785 = vld [vmem:[%s231 + $0x1a0] sm:$0xff]
      %v786 = vld [vmem:[%s231 + $0x1a8] sm:$0xff]
      %v787 = vld [vmem:[%s231 + $0x1b0] sm:$0xff]
      %v788 = vld [vmem:[%s231 + $0x1b8] sm:$0xff]
      %v789 = vld [vmem:[%s231 + $0x1c0] sm:$0xff]
      %v790 = vld [vmem:[%s231 + $0x1c8] sm:$0xff]
      %v791 = vld [vmem:[%s231 + $0x1d0] sm:$0xff]
      %v792 = vld [vmem:[%s231 + $0x1d8] sm:$0xff]
      %v793 = vld [vmem:[%s231 + $0x1e0] sm:$0xff]
      %v794 = vld [vmem:[%s231 + $0x1e8] sm:$0xff]
      %v795 = vld [vmem:[%s231 + $0x1f0] sm:$0xff]
      %v796 = vld [vmem:[%s231 + $0x1f8] sm:$0xff]
      %v797 = vld [vmem:[%s231 + $0x200] sm:$0xff]
      %v798 = vld [vmem:[%s231 + $0x208] sm:$0xff]
      %v799 = vld [vmem:[%s231 + $0x210] sm:$0xff]
      %v800 = vld [vmem:[%s231 + $0x218] sm:$0xff]
      %v801 = vld [vmem:[%s231 + $0x220] sm:$0xff]
      %v802 = vld [vmem:[%s231 + $0x228] sm:$0xff]
      %v803 = vld [vmem:[%s231 + $0x230] sm:$0xff]
      %v804 = vld [vmem:[%s231 + $0x238] sm:$0xff]
      %v805 = vld [vmem:[%s231 + $0x240] sm:$0xff]
      %v806 = vld [vmem:[%s231 + $0x248] sm:$0xff]
      %v807 = vld [vmem:[%s231 + $0x250] sm:$0xff]
      %v808 = vld [vmem:[%s231 + $0x258] sm:$0xff]
      %v809 = vld [vmem:[%s231 + $0x260] sm:$0xff]
      %v810 = vld [vmem:[%s231 + $0x268] sm:$0xff]
      %v811 = vld [vmem:[%s231 + $0x270] sm:$0xff]
      %v812 = vld [vmem:[%s231 + $0x278] sm:$0xff]
      %v813 = vld [vmem:[%s231 + $0x280] sm:$0xff]
      %v814 = vld [vmem:[%s231 + $0x288] sm:$0xff]
      %v815 = vld [vmem:[%s231 + $0x290] sm:$0xff]
      %v816 = vld [vmem:[%s231 + $0x298] sm:$0xff]
      %v817 = vld [vmem:[%s231 + $0x2a0] sm:$0xff]
      %v818 = vld [vmem:[%s231 + $0x2a8] sm:$0xff]
      %v819 = vld [vmem:[%s231 + $0x2b0] sm:$0xff]
      %v820 = vld [vmem:[%s231 + $0x2b8] sm:$0xff]
      %v821 = vld [vmem:[%s231 + $0x2c0] sm:$0xff]
      %v822 = vld [vmem:[%s231 + $0x2c8] sm:$0xff]
      %v823 = vld [vmem:[%s231 + $0x2d0] sm:$0xff]
      %v824 = vld [vmem:[%s231 + $0x2d8] sm:$0xff]
      %v825 = vld [vmem:[%s231 + $0x2e0] sm:$0xff]
      %v826 = vld [vmem:[%s231 + $0x2e8] sm:$0xff]
      %v827 = vld [vmem:[%s231 + $0x2f0] sm:$0xff]
      %v828 = vld [vmem:[%s231 + $0x2f8] sm:$0xff]
      %v829 = vadd.f32 %v447, %v733
      %v830 = vadd.f32 %v450, %v734
      %v831 = vadd.f32 %v453, %v735
      %v832 = vadd.f32 %v456, %v736
      %v833 = vadd.f32 %v459, %v737
      %v834 = vadd.f32 %v462, %v738
      %v835 = vadd.f32 %v465, %v739
      %v836 = vadd.f32 %v468, %v740
      %v837 = vadd.f32 %v471, %v741
      %v838 = vadd.f32 %v474, %v742
      %v839 = vadd.f32 %v477, %v743
      %v840 = vadd.f32 %v480, %v744
      %v841 = vadd.f32 %v483, %v745
      %v842 = vadd.f32 %v486, %v746
      %v843 = vadd.f32 %v489, %v747
      %v844 = vadd.f32 %v492, %v748
      %v845 = vadd.f32 %v495, %v749
      %v846 = vadd.f32 %v498, %v750
      %v847 = vadd.f32 %v501, %v751
      %v848 = vadd.f32 %v504, %v752
      %v849 = vadd.f32 %v507, %v753
      %v850 = vadd.f32 %v510, %v754
      %v851 = vadd.f32 %v513, %v755
      %v852 = vadd.f32 %v516, %v756
      %v853 = vadd.f32 %v519, %v757
      %v854 = vadd.f32 %v522, %v758
      %v855 = vadd.f32 %v525, %v759
      %v856 = vadd.f32 %v528, %v760
      %v857 = vadd.f32 %v531, %v761
      %v858 = vadd.f32 %v534, %v762
      %v859 = vadd.f32 %v537, %v763
      %v860 = vadd.f32 %v540, %v764
      %v861 = vadd.f32 %v543, %v765
      %v862 = vadd.f32 %v546, %v766
      %v863 = vadd.f32 %v549, %v767
      %v864 = vadd.f32 %v552, %v768
      %v865 = vadd.f32 %v555, %v769
      %v866 = vadd.f32 %v558, %v770
      %v867 = vadd.f32 %v561, %v771
      %v868 = vadd.f32 %v564, %v772
      %v869 = vadd.f32 %v567, %v773
      %v870 = vadd.f32 %v570, %v774
      %v871 = vadd.f32 %v573, %v775
      %v872 = vadd.f32 %v576, %v776
      %v873 = vadd.f32 %v579, %v777
      %v874 = vadd.f32 %v582, %v778
      %v875 = vadd.f32 %v585, %v779
      %v876 = vadd.f32 %v588, %v780
      %v877 = vadd.f32 %v591, %v781
      %v878 = vadd.f32 %v594, %v782
      %v879 = vadd.f32 %v597, %v783
      %v880 = vadd.f32 %v600, %v784
      %v881 = vadd.f32 %v603, %v785
      %v882 = vadd.f32 %v606, %v786
      %v883 = vadd.f32 %v609, %v787
      %v884 = vadd.f32 %v612, %v788
      %v885 = vadd.f32 %v615, %v789
      %v886 = vadd.f32 %v618, %v790
      %v887 = vadd.f32 %v621, %v791
      %v888 = vadd.f32 %v624, %v792
      %v889 = vadd.f32 %v627, %v793
      %v890 = vadd.f32 %v630, %v794
      %v891 = vadd.f32 %v633, %v795
      %v892 = vadd.f32 %v636, %v796
      %v893 = vadd.f32 %v639, %v797
      %v894 = vadd.f32 %v642, %v798
      %v895 = vadd.f32 %v645, %v799
      %v896 = vadd.f32 %v648, %v800
      %v897 = vadd.f32 %v651, %v801
      %v898 = vadd.f32 %v654, %v802
      %v899 = vadd.f32 %v657, %v803
      %v900 = vadd.f32 %v660, %v804
      %v901 = vadd.f32 %v663, %v805
      %v902 = vadd.f32 %v666, %v806
      %v903 = vadd.f32 %v669, %v807
      %v904 = vadd.f32 %v672, %v808
      %v905 = vadd.f32 %v675, %v809
      %v906 = vadd.f32 %v678, %v810
      %v907 = vadd.f32 %v681, %v811
      %v908 = vadd.f32 %v684, %v812
      %v909 = vadd.f32 %v687, %v813
      %v910 = vadd.f32 %v690, %v814
      %v911 = vadd.f32 %v693, %v815
      %v912 = vadd.f32 %v696, %v816
      %v913 = vadd.f32 %v699, %v817
      %v914 = vadd.f32 %v702, %v818
      %v915 = vadd.f32 %v705, %v819
      %v916 = vadd.f32 %v708, %v820
      %v917 = vadd.f32 %v711, %v821
      %v918 = vadd.f32 %v714, %v822
      %v919 = vadd.f32 %v717, %v823
      %v920 = vadd.f32 %v720, %v824
      %v921 = vadd.f32 %v723, %v825
      %v922 = vadd.f32 %v726, %v826
      %v923 = vadd.f32 %v729, %v827
      %v924 = vadd.f32 %v732, %v828
      %v925 = vxor.u32 %v829, 2147483648
      %v926 = vxor.u32 %v830, 2147483648
      %v927 = vxor.u32 %v831, 2147483648
      %v928 = vxor.u32 %v832, 2147483648
      %v929 = vxor.u32 %v833, 2147483648
      %v930 = vxor.u32 %v834, 2147483648
      %v931 = vxor.u32 %v835, 2147483648
      %v932 = vxor.u32 %v836, 2147483648
      %v933 = vxor.u32 %v837, 2147483648
      %v934 = vxor.u32 %v838, 2147483648
      %v935 = vxor.u32 %v839, 2147483648
      %v936 = vxor.u32 %v840, 2147483648
      %v937 = vxor.u32 %v841, 2147483648
      %v938 = vxor.u32 %v842, 2147483648
      %v939 = vxor.u32 %v843, 2147483648
      %v940 = vxor.u32 %v844, 2147483648
      %v941 = vxor.u32 %v845, 2147483648
      %v942 = vxor.u32 %v846, 2147483648
      %v943 = vxor.u32 %v847, 2147483648
      %v944 = vxor.u32 %v848, 2147483648
      %v945 = vxor.u32 %v849, 2147483648
      %v946 = vxor.u32 %v850, 2147483648
      %v947 = vxor.u32 %v851, 2147483648
      %v948 = vxor.u32 %v852, 2147483648
      %v949 = vxor.u32 %v853, 2147483648
      %v950 = vxor.u32 %v854, 2147483648
      %v951 = vxor.u32 %v855, 2147483648
      %v952 = vxor.u32 %v856, 2147483648
      %v953 = vxor.u32 %v857, 2147483648
      %v954 = vxor.u32 %v858, 2147483648
      %v955 = vxor.u32 %v859, 2147483648
      %v956 = vxor.u32 %v860, 2147483648
      %v957 = vxor.u32 %v861, 2147483648
      %v958 = vxor.u32 %v862, 2147483648
      %v959 = vxor.u32 %v863, 2147483648
      %v960 = vxor.u32 %v864, 2147483648
      %v961 = vxor.u32 %v865, 2147483648
      %v962 = vxor.u32 %v866, 2147483648
      %v963 = vxor.u32 %v867, 2147483648
      %v964 = vxor.u32 %v868, 2147483648
      %v965 = vxor.u32 %v869, 2147483648
      %v966 = vxor.u32 %v870, 2147483648
      %v967 = vxor.u32 %v871, 2147483648
      %v968 = vxor.u32 %v872, 2147483648
      %v969 = vxor.u32 %v873, 2147483648
      %v970 = vxor.u32 %v874, 2147483648
      %v971 = vxor.u32 %v875, 2147483648
      %v972 = vxor.u32 %v876, 2147483648
      %v973 = vxor.u32 %v877, 2147483648
      %v974 = vxor.u32 %v878, 2147483648
      %v975 = vxor.u32 %v879, 2147483648
      %v976 = vxor.u32 %v880, 2147483648
      %v977 = vxor.u32 %v881, 2147483648
      %v978 = vxor.u32 %v882, 2147483648
      %v979 = vxor.u32 %v883, 2147483648
      %v980 = vxor.u32 %v884, 2147483648
      %v981 = vxor.u32 %v885, 2147483648
      %v982 = vxor.u32 %v886, 2147483648
      %v983 = vxor.u32 %v887, 2147483648
      %v984 = vxor.u32 %v888, 2147483648
      %v985 = vxor.u32 %v889, 2147483648
      %v986 = vxor.u32 %v890, 2147483648
      %v987 = vxor.u32 %v891, 2147483648
      %v988 = vxor.u32 %v892, 2147483648
      %v989 = vxor.u32 %v893, 2147483648
      %v990 = vxor.u32 %v894, 2147483648
      %v991 = vxor.u32 %v895, 2147483648
      %v992 = vxor.u32 %v896, 2147483648
      %v993 = vxor.u32 %v897, 2147483648
      %v994 = vxor.u32 %v898, 2147483648
      %v995 = vxor.u32 %v899, 2147483648
      %v996 = vxor.u32 %v900, 2147483648
      %v997 = vxor.u32 %v901, 2147483648
      %v998 = vxor.u32 %v902, 2147483648
      %v999 = vxor.u32 %v903, 2147483648
      %v1000 = vxor.u32 %v904, 2147483648
      %v1001 = vxor.u32 %v905, 2147483648
      %v1002 = vxor.u32 %v906, 2147483648
      %v1003 = vxor.u32 %v907, 2147483648
      %v1004 = vxor.u32 %v908, 2147483648
      %v1005 = vxor.u32 %v909, 2147483648
      %v1006 = vxor.u32 %v910, 2147483648
      %v1007 = vxor.u32 %v911, 2147483648
      %v1008 = vxor.u32 %v912, 2147483648
      %v1009 = vxor.u32 %v913, 2147483648
      %v1010 = vxor.u32 %v914, 2147483648
      %v1011 = vxor.u32 %v915, 2147483648
      %v1012 = vxor.u32 %v916, 2147483648
      %v1013 = vxor.u32 %v917, 2147483648
      %v1014 = vxor.u32 %v918, 2147483648
      %v1015 = vxor.u32 %v919, 2147483648
      %v1016 = vxor.u32 %v920, 2147483648
      %v1017 = vxor.u32 %v921, 2147483648
      %v1018 = vxor.u32 %v922, 2147483648
      %v1019 = vxor.u32 %v923, 2147483648
      %v1020 = vxor.u32 %v924, 2147483648
      %v1021 = vmul.f32 %v925, 1.442695
      %v1022 = vpow.pop %v1021
      %v1023 = vmul.f32 %v926, 1.442695
      %v1024 = vpow.pop %v1023
      %v1025 = vmul.f32 %v927, 1.442695
      %v1026 = vpow.pop %v1025
      %v1027 = vmul.f32 %v928, 1.442695
      %v1028 = vpow.pop %v1027
      %v1029 = vmul.f32 %v929, 1.442695
      %v1030 = vpow.pop %v1029
      %v1031 = vmul.f32 %v930, 1.442695
      %v1032 = vpow.pop %v1031
      %v1033 = vmul.f32 %v931, 1.442695
      %v1034 = vpow.pop %v1033
      %v1035 = vmul.f32 %v932, 1.442695
      %v1036 = vpow.pop %v1035
      %v1037 = vmul.f32 %v933, 1.442695
      %v1038 = vpow.pop %v1037
      %v1039 = vmul.f32 %v934, 1.442695
      %v1040 = vpow.pop %v1039
      %v1041 = vmul.f32 %v935, 1.442695
      %v1042 = vpow.pop %v1041
      %v1043 = vmul.f32 %v936, 1.442695
      %v1044 = vpow.pop %v1043
      %v1045 = vmul.f32 %v937, 1.442695
      %v1046 = vpow.pop %v1045
      %v1047 = vmul.f32 %v938, 1.442695
      %v1048 = vpow.pop %v1047
      %v1049 = vmul.f32 %v939, 1.442695
      %v1050 = vpow.pop %v1049
      %v1051 = vmul.f32 %v940, 1.442695
      %v1052 = vpow.pop %v1051
      %v1053 = vmul.f32 %v941, 1.442695
      %v1054 = vpow.pop %v1053
      %v1055 = vmul.f32 %v942, 1.442695
      %v1056 = vpow.pop %v1055
      %v1057 = vmul.f32 %v943, 1.442695
      %v1058 = vpow.pop %v1057
      %v1059 = vmul.f32 %v944, 1.442695
      %v1060 = vpow.pop %v1059
      %v1061 = vmul.f32 %v945, 1.442695
      %v1062 = vpow.pop %v1061
      %v1063 = vmul.f32 %v946, 1.442695
      %v1064 = vpow.pop %v1063
      %v1065 = vmul.f32 %v947, 1.442695
      %v1066 = vpow.pop %v1065
      %v1067 = vmul.f32 %v948, 1.442695
      %v1068 = vpow.pop %v1067
      %v1069 = vmul.f32 %v949, 1.442695
      %v1070 = vpow.pop %v1069
      %v1071 = vmul.f32 %v950, 1.442695
      %v1072 = vpow.pop %v1071
      %v1073 = vmul.f32 %v951, 1.442695
      %v1074 = vpow.pop %v1073
      %v1075 = vmul.f32 %v952, 1.442695
      %v1076 = vpow.pop %v1075
      %v1077 = vmul.f32 %v953, 1.442695
      %v1078 = vpow.pop %v1077
      %v1079 = vmul.f32 %v954, 1.442695
      %v1080 = vpow.pop %v1079
      %v1081 = vmul.f32 %v955, 1.442695
      %v1082 = vpow.pop %v1081
      %v1083 = vmul.f32 %v956, 1.442695
      %v1084 = vpow.pop %v1083
      %v1085 = vmul.f32 %v957, 1.442695
      %v1086 = vpow.pop %v1085
      %v1087 = vmul.f32 %v958, 1.442695
      %v1088 = vpow.pop %v1087
      %v1089 = vmul.f32 %v959, 1.442695
      %v1090 = vpow.pop %v1089
      %v1091 = vmul.f32 %v960, 1.442695
      %v1092 = vpow.pop %v1091
      %v1093 = vmul.f32 %v961, 1.442695
      %v1094 = vpow.pop %v1093
      %v1095 = vmul.f32 %v962, 1.442695
      %v1096 = vpow.pop %v1095
      %v1097 = vmul.f32 %v963, 1.442695
      %v1098 = vpow.pop %v1097
      %v1099 = vmul.f32 %v964, 1.442695
      %v1100 = vpow.pop %v1099
      %v1101 = vmul.f32 %v965, 1.442695
      %v1102 = vpow.pop %v1101
      %v1103 = vmul.f32 %v966, 1.442695
      %v1104 = vpow.pop %v1103
      %v1105 = vmul.f32 %v967, 1.442695
      %v1106 = vpow.pop %v1105
      %v1107 = vmul.f32 %v968, 1.442695
      %v1108 = vpow.pop %v1107
      %v1109 = vmul.f32 %v969, 1.442695
      %v1110 = vpow.pop %v1109
      %v1111 = vmul.f32 %v970, 1.442695
      %v1112 = vpow.pop %v1111
      %v1113 = vmul.f32 %v971, 1.442695
      %v1114 = vpow.pop %v1113
      %v1115 = vmul.f32 %v972, 1.442695
      %v1116 = vpow.pop %v1115
      %v1117 = vmul.f32 %v973, 1.442695
      %v1118 = vpow.pop %v1117
      %v1119 = vmul.f32 %v974, 1.442695
      %v1120 = vpow.pop %v1119
      %v1121 = vmul.f32 %v975, 1.442695
      %v1122 = vpow.pop %v1121
      %v1123 = vmul.f32 %v976, 1.442695
      %v1124 = vpow.pop %v1123
      %v1125 = vmul.f32 %v977, 1.442695
      %v1126 = vpow.pop %v1125
      %v1127 = vmul.f32 %v978, 1.442695
      %v1128 = vpow.pop %v1127
      %v1129 = vmul.f32 %v979, 1.442695
      %v1130 = vpow.pop %v1129
      %v1131 = vmul.f32 %v980, 1.442695
      %v1132 = vpow.pop %v1131
      %v1133 = vmul.f32 %v981, 1.442695
      %v1134 = vpow.pop %v1133
      %v1135 = vmul.f32 %v982, 1.442695
      %v1136 = vpow.pop %v1135
      %v1137 = vmul.f32 %v983, 1.442695
      %v1138 = vpow.pop %v1137
      %v1139 = vmul.f32 %v984, 1.442695
      %v1140 = vpow.pop %v1139
      %v1141 = vmul.f32 %v985, 1.442695
      %v1142 = vpow.pop %v1141
      %v1143 = vmul.f32 %v986, 1.442695
      %v1144 = vpow.pop %v1143
      %v1145 = vmul.f32 %v987, 1.442695
      %v1146 = vpow.pop %v1145
      %v1147 = vmul.f32 %v988, 1.442695
      %v1148 = vpow.pop %v1147
      %v1149 = vmul.f32 %v989, 1.442695
      %v1150 = vpow.pop %v1149
      %v1151 = vmul.f32 %v990, 1.442695
      %v1152 = vpow.pop %v1151
      %v1153 = vmul.f32 %v991, 1.442695
      %v1154 = vpow.pop %v1153
      %v1155 = vmul.f32 %v992, 1.442695
      %v1156 = vpow.pop %v1155
      %v1157 = vmul.f32 %v993, 1.442695
      %v1158 = vpow.pop %v1157
      %v1159 = vmul.f32 %v994, 1.442695
      %v1160 = vpow.pop %v1159
      %v1161 = vmul.f32 %v995, 1.442695
      %v1162 = vpow.pop %v1161
      %v1163 = vmul.f32 %v996, 1.442695
      %v1164 = vpow.pop %v1163
      %v1165 = vmul.f32 %v997, 1.442695
      %v1166 = vpow.pop %v1165
      %v1167 = vmul.f32 %v998, 1.442695
      %v1168 = vpow.pop %v1167
      %v1169 = vmul.f32 %v999, 1.442695
      %v1170 = vpow.pop %v1169
      %v1171 = vmul.f32 %v1000, 1.442695
      %v1172 = vpow.pop %v1171
      %v1173 = vmul.f32 %v1001, 1.442695
      %v1174 = vpow.pop %v1173
      %v1175 = vmul.f32 %v1002, 1.442695
      %v1176 = vpow.pop %v1175
      %v1177 = vmul.f32 %v1003, 1.442695
      %v1178 = vpow.pop %v1177
      %v1179 = vmul.f32 %v1004, 1.442695
      %v1180 = vpow.pop %v1179
      %v1181 = vmul.f32 %v1005, 1.442695
      %v1182 = vpow.pop %v1181
      %v1183 = vmul.f32 %v1006, 1.442695
      %v1184 = vpow.pop %v1183
      %v1185 = vmul.f32 %v1007, 1.442695
      %v1186 = vpow.pop %v1185
      %v1187 = vmul.f32 %v1008, 1.442695
      %v1188 = vpow.pop %v1187
      %v1189 = vmul.f32 %v1009, 1.442695
      %v1190 = vpow.pop %v1189
      %v1191 = vmul.f32 %v1010, 1.442695
      %v1192 = vpow.pop %v1191
      %v1193 = vmul.f32 %v1011, 1.442695
      %v1194 = vpow.pop %v1193
      %v1195 = vmul.f32 %v1012, 1.442695
      %v1196 = vpow.pop %v1195
      %v1197 = vmul.f32 %v1013, 1.442695
      %v1198 = vpow.pop %v1197
      %v1199 = vmul.f32 %v1014, 1.442695
      %v1200 = vpow.pop %v1199
      %v1201 = vmul.f32 %v1015, 1.442695
      %v1202 = vpow.pop %v1201
      %v1203 = vmul.f32 %v1016, 1.442695
      %v1204 = vpow.pop %v1203
      %v1205 = vmul.f32 %v1017, 1.442695
      %v1206 = vpow.pop %v1205
      %v1207 = vmul.f32 %v1018, 1.442695
      %v1208 = vpow.pop %v1207
      %v1209 = vmul.f32 %v1019, 1.442695
      %v1210 = vpow.pop %v1209
      %v1211 = vmul.f32 %v1020, 1.442695
      %v1212 = vpow.pop %v1211
      %v1213 = vadd.f32 %v1022, 1.0
      %v1214 = vadd.f32 %v1024, 1.0
      %v1215 = vadd.f32 %v1026, 1.0
      %v1216 = vadd.f32 %v1028, 1.0
      %v1217 = vadd.f32 %v1030, 1.0
      %v1218 = vadd.f32 %v1032, 1.0
      %v1219 = vadd.f32 %v1034, 1.0
      %v1220 = vadd.f32 %v1036, 1.0
      %v1221 = vadd.f32 %v1038, 1.0
      %v1222 = vadd.f32 %v1040, 1.0
      %v1223 = vadd.f32 %v1042, 1.0
      %v1224 = vadd.f32 %v1044, 1.0
      %v1225 = vadd.f32 %v1046, 1.0
      %v1226 = vadd.f32 %v1048, 1.0
      %v1227 = vadd.f32 %v1050, 1.0
      %v1228 = vadd.f32 %v1052, 1.0
      %v1229 = vadd.f32 %v1054, 1.0
      %v1230 = vadd.f32 %v1056, 1.0
      %v1231 = vadd.f32 %v1058, 1.0
      %v1232 = vadd.f32 %v1060, 1.0
      %v1233 = vadd.f32 %v1062, 1.0
      %v1234 = vadd.f32 %v1064, 1.0
      %v1235 = vadd.f32 %v1066, 1.0
      %v1236 = vadd.f32 %v1068, 1.0
      %v1237 = vadd.f32 %v1070, 1.0
      %v1238 = vadd.f32 %v1072, 1.0
      %v1239 = vadd.f32 %v1074, 1.0
      %v1240 = vadd.f32 %v1076, 1.0
      %v1241 = vadd.f32 %v1078, 1.0
      %v1242 = vadd.f32 %v1080, 1.0
      %v1243 = vadd.f32 %v1082, 1.0
      %v1244 = vadd.f32 %v1084, 1.0
      %v1245 = vadd.f32 %v1086, 1.0
      %v1246 = vadd.f32 %v1088, 1.0
      %v1247 = vadd.f32 %v1090, 1.0
      %v1248 = vadd.f32 %v1092, 1.0
      %v1249 = vadd.f32 %v1094, 1.0
      %v1250 = vadd.f32 %v1096, 1.0
      %v1251 = vadd.f32 %v1098, 1.0
      %v1252 = vadd.f32 %v1100, 1.0
      %v1253 = vadd.f32 %v1102, 1.0
      %v1254 = vadd.f32 %v1104, 1.0
      %v1255 = vadd.f32 %v1106, 1.0
      %v1256 = vadd.f32 %v1108, 1.0
      %v1257 = vadd.f32 %v1110, 1.0
      %v1258 = vadd.f32 %v1112, 1.0
      %v1259 = vadd.f32 %v1114, 1.0
      %v1260 = vadd.f32 %v1116, 1.0
      %v1261 = vadd.f32 %v1118, 1.0
      %v1262 = vadd.f32 %v1120, 1.0
      %v1263 = vadd.f32 %v1122, 1.0
      %v1264 = vadd.f32 %v1124, 1.0
      %v1265 = vadd.f32 %v1126, 1.0
      %v1266 = vadd.f32 %v1128, 1.0
      %v1267 = vadd.f32 %v1130, 1.0
      %v1268 = vadd.f32 %v1132, 1.0
      %v1269 = vadd.f32 %v1134, 1.0
      %v1270 = vadd.f32 %v1136, 1.0
      %v1271 = vadd.f32 %v1138, 1.0
      %v1272 = vadd.f32 %v1140, 1.0
      %v1273 = vadd.f32 %v1142, 1.0
      %v1274 = vadd.f32 %v1144, 1.0
      %v1275 = vadd.f32 %v1146, 1.0
      %v1276 = vadd.f32 %v1148, 1.0
      %v1277 = vadd.f32 %v1150, 1.0
      %v1278 = vadd.f32 %v1152, 1.0
      %v1279 = vadd.f32 %v1154, 1.0
      %v1280 = vadd.f32 %v1156, 1.0
      %v1281 = vadd.f32 %v1158, 1.0
      %v1282 = vadd.f32 %v1160, 1.0
      %v1283 = vadd.f32 %v1162, 1.0
      %v1284 = vadd.f32 %v1164, 1.0
      %v1285 = vadd.f32 %v1166, 1.0
      %v1286 = vadd.f32 %v1168, 1.0
      %v1287 = vadd.f32 %v1170, 1.0
      %v1288 = vadd.f32 %v1172, 1.0
      %v1289 = vadd.f32 %v1174, 1.0
      %v1290 = vadd.f32 %v1176, 1.0
      %v1291 = vadd.f32 %v1178, 1.0
      %v1292 = vadd.f32 %v1180, 1.0
      %v1293 = vadd.f32 %v1182, 1.0
      %v1294 = vadd.f32 %v1184, 1.0
      %v1295 = vadd.f32 %v1186, 1.0
      %v1296 = vadd.f32 %v1188, 1.0
      %v1297 = vadd.f32 %v1190, 1.0
      %v1298 = vadd.f32 %v1192, 1.0
      %v1299 = vadd.f32 %v1194, 1.0
      %v1300 = vadd.f32 %v1196, 1.0
      %v1301 = vadd.f32 %v1198, 1.0
      %v1302 = vadd.f32 %v1200, 1.0
      %v1303 = vadd.f32 %v1202, 1.0
      %v1304 = vadd.f32 %v1204, 1.0
      %v1305 = vadd.f32 %v1206, 1.0
      %v1306 = vadd.f32 %v1208, 1.0
      %v1307 = vadd.f32 %v1210, 1.0
      %v1308 = vadd.f32 %v1212, 1.0
      %v1309 = vrcp.pop %v1213
      %v1310 = vmul.f32 1.0, %v1309
      %v1311 = vrcp.pop %v1214
      %v1312 = vmul.f32 1.0, %v1311
      %v1313 = vrcp.pop %v1215
      %v1314 = vmul.f32 1.0, %v1313
      %v1315 = vrcp.pop %v1216
      %v1316 = vmul.f32 1.0, %v1315
      %v1317 = vrcp.pop %v1217
      %v1318 = vmul.f32 1.0, %v1317
      %v1319 = vrcp.pop %v1218
      %v1320 = vmul.f32 1.0, %v1319
      %v1321 = vrcp.pop %v1219
      %v1322 = vmul.f32 1.0, %v1321
      %v1323 = vrcp.pop %v1220
      %v1324 = vmul.f32 1.0, %v1323
      %v1325 = vrcp.pop %v1221
      %v1326 = vmul.f32 1.0, %v1325
      %v1327 = vrcp.pop %v1222
      %v1328 = vmul.f32 1.0, %v1327
      %v1329 = vrcp.pop %v1223
      %v1330 = vmul.f32 1.0, %v1329
      %v1331 = vrcp.pop %v1224
      %v1332 = vmul.f32 1.0, %v1331
      %v1333 = vrcp.pop %v1225
      %v1334 = vmul.f32 1.0, %v1333
      %v1335 = vrcp.pop %v1226
      %v1336 = vmul.f32 1.0, %v1335
      %v1337 = vrcp.pop %v1227
      %v1338 = vmul.f32 1.0, %v1337
      %v1339 = vrcp.pop %v1228
      %v1340 = vmul.f32 1.0, %v1339
      %v1341 = vrcp.pop %v1229
      %v1342 = vmul.f32 1.0, %v1341
      %v1343 = vrcp.pop %v1230
      %v1344 = vmul.f32 1.0, %v1343
      %v1345 = vrcp.pop %v1231
      %v1346 = vmul.f32 1.0, %v1345
      %v1347 = vrcp.pop %v1232
      %v1348 = vmul.f32 1.0, %v1347
      %v1349 = vrcp.pop %v1233
      %v1350 = vmul.f32 1.0, %v1349
      %v1351 = vrcp.pop %v1234
      %v1352 = vmul.f32 1.0, %v1351
      %v1353 = vrcp.pop %v1235
      %v1354 = vmul.f32 1.0, %v1353
      %v1355 = vrcp.pop %v1236
      %v1356 = vmul.f32 1.0, %v1355
      %v1357 = vrcp.pop %v1237
      %v1358 = vmul.f32 1.0, %v1357
      %v1359 = vrcp.pop %v1238
      %v1360 = vmul.f32 1.0, %v1359
      %v1361 = vrcp.pop %v1239
      %v1362 = vmul.f32 1.0, %v1361
      %v1363 = vrcp.pop %v1240
      %v1364 = vmul.f32 1.0, %v1363
      %v1365 = vrcp.pop %v1241
      %v1366 = vmul.f32 1.0, %v1365
      %v1367 = vrcp.pop %v1242
      %v1368 = vmul.f32 1.0, %v1367
      %v1369 = vrcp.pop %v1243
      %v1370 = vmul.f32 1.0, %v1369
      %v1371 = vrcp.pop %v1244
      %v1372 = vmul.f32 1.0, %v1371
      %v1373 = vrcp.pop %v1245
      %v1374 = vmul.f32 1.0, %v1373
      %v1375 = vrcp.pop %v1246
      %v1376 = vmul.f32 1.0, %v1375
      %v1377 = vrcp.pop %v1247
      %v1378 = vmul.f32 1.0, %v1377
      %v1379 = vrcp.pop %v1248
      %v1380 = vmul.f32 1.0, %v1379
      %v1381 = vrcp.pop %v1249
      %v1382 = vmul.f32 1.0, %v1381
      %v1383 = vrcp.pop %v1250
      %v1384 = vmul.f32 1.0, %v1383
      %v1385 = vrcp.pop %v1251
      %v1386 = vmul.f32 1.0, %v1385
      %v1387 = vrcp.pop %v1252
      %v1388 = vmul.f32 1.0, %v1387
      %v1389 = vrcp.pop %v1253
      %v1390 = vmul.f32 1.0, %v1389
      %v1391 = vrcp.pop %v1254
      %v1392 = vmul.f32 1.0, %v1391
      %v1393 = vrcp.pop %v1255
      %v1394 = vmul.f32 1.0, %v1393
      %v1395 = vrcp.pop %v1256
      %v1396 = vmul.f32 1.0, %v1395
      %v1397 = vrcp.pop %v1257
      %v1398 = vmul.f32 1.0, %v1397
      %v1399 = vrcp.pop %v1258
      %v1400 = vmul.f32 1.0, %v1399
      %v1401 = vrcp.pop %v1259
      %v1402 = vmul.f32 1.0, %v1401
      %v1403 = vrcp.pop %v1260
      %v1404 = vmul.f32 1.0, %v1403
      %v1405 = vrcp.pop %v1261
      %v1406 = vmul.f32 1.0, %v1405
      %v1407 = vrcp.pop %v1262
      %v1408 = vmul.f32 1.0, %v1407
      %v1409 = vrcp.pop %v1263
      %v1410 = vmul.f32 1.0, %v1409
      %v1411 = vrcp.pop %v1264
      %v1412 = vmul.f32 1.0, %v1411
      %v1413 = vrcp.pop %v1265
      %v1414 = vmul.f32 1.0, %v1413
      %v1415 = vrcp.pop %v1266
      %v1416 = vmul.f32 1.0, %v1415
      %v1417 = vrcp.pop %v1267
      %v1418 = vmul.f32 1.0, %v1417
      %v1419 = vrcp.pop %v1268
      %v1420 = vmul.f32 1.0, %v1419
      %v1421 = vrcp.pop %v1269
      %v1422 = vmul.f32 1.0, %v1421
      %v1423 = vrcp.pop %v1270
      %v1424 = vmul.f32 1.0, %v1423
      %v1425 = vrcp.pop %v1271
      %v1426 = vmul.f32 1.0, %v1425
      %v1427 = vrcp.pop %v1272
      %v1428 = vmul.f32 1.0, %v1427
      %v1429 = vrcp.pop %v1273
      %v1430 = vmul.f32 1.0, %v1429
      %v1431 = vrcp.pop %v1274
      %v1432 = vmul.f32 1.0, %v1431
      %v1433 = vrcp.pop %v1275
      %v1434 = vmul.f32 1.0, %v1433
      %v1435 = vrcp.pop %v1276
      %v1436 = vmul.f32 1.0, %v1435
      %v1437 = vrcp.pop %v1277
      %v1438 = vmul.f32 1.0, %v1437
      %v1439 = vrcp.pop %v1278
      %v1440 = vmul.f32 1.0, %v1439
      %v1441 = vrcp.pop %v1279
      %v1442 = vmul.f32 1.0, %v1441
      %v1443 = vrcp.pop %v1280
      %v1444 = vmul.f32 1.0, %v1443
      %v1445 = vrcp.pop %v1281
      %v1446 = vmul.f32 1.0, %v1445
      %v1447 = vrcp.pop %v1282
      %v1448 = vmul.f32 1.0, %v1447
      %v1449 = vrcp.pop %v1283
      %v1450 = vmul.f32 1.0, %v1449
      %v1451 = vrcp.pop %v1284
      %v1452 = vmul.f32 1.0, %v1451
      %v1453 = vrcp.pop %v1285
      %v1454 = vmul.f32 1.0, %v1453
      %v1455 = vrcp.pop %v1286
      %v1456 = vmul.f32 1.0, %v1455
      %v1457 = vrcp.pop %v1287
      %v1458 = vmul.f32 1.0, %v1457
      %v1459 = vrcp.pop %v1288
      %v1460 = vmul.f32 1.0, %v1459
      %v1461 = vrcp.pop %v1289
      %v1462 = vmul.f32 1.0, %v1461
      %v1463 = vrcp.pop %v1290
      %v1464 = vmul.f32 1.0, %v1463
      %v1465 = vrcp.pop %v1291
      %v1466 = vmul.f32 1.0, %v1465
      %v1467 = vrcp.pop %v1292
      %v1468 = vmul.f32 1.0, %v1467
      %v1469 = vrcp.pop %v1293
      %v1470 = vmul.f32 1.0, %v1469
      %v1471 = vrcp.pop %v1294
      %v1472 = vmul.f32 1.0, %v1471
      %v1473 = vrcp.pop %v1295
      %v1474 = vmul.f32 1.0, %v1473
      %v1475 = vrcp.pop %v1296
      %v1476 = vmul.f32 1.0, %v1475
      %v1477 = vrcp.pop %v1297
      %v1478 = vmul.f32 1.0, %v1477
      %v1479 = vrcp.pop %v1298
      %v1480 = vmul.f32 1.0, %v1479
      %v1481 = vrcp.pop %v1299
      %v1482 = vmul.f32 1.0, %v1481
      %v1483 = vrcp.pop %v1300
      %v1484 = vmul.f32 1.0, %v1483
      %v1485 = vrcp.pop %v1301
      %v1486 = vmul.f32 1.0, %v1485
      %v1487 = vrcp.pop %v1302
      %v1488 = vmul.f32 1.0, %v1487
      %v1489 = vrcp.pop %v1303
      %v1490 = vmul.f32 1.0, %v1489
      %v1491 = vrcp.pop %v1304
      %v1492 = vmul.f32 1.0, %v1491
      %v1493 = vrcp.pop %v1305
      %v1494 = vmul.f32 1.0, %v1493
      %v1495 = vrcp.pop %v1306
      %v1496 = vmul.f32 1.0, %v1495
      %v1497 = vrcp.pop %v1307
      %v1498 = vmul.f32 1.0, %v1497
      %v1499 = vrcp.pop %v1308
      %v1500 = vmul.f32 1.0, %v1499
      %v1501 = vld [vmem:[%s237] sm:$0xff]
      %v1502 = vld [vmem:[%s237 + $0x8] sm:$0xff]
      %v1503 = vld [vmem:[%s237 + $0x10] sm:$0xff]
      %v1504 = vld [vmem:[%s237 + $0x18] sm:$0xff]
      %v1505 = vld [vmem:[%s237 + $0x20] sm:$0xff]
      %v1506 = vld [vmem:[%s237 + $0x28] sm:$0xff]
      %v1507 = vld [vmem:[%s237 + $0x30] sm:$0xff]
      %v1508 = vld [vmem:[%s237 + $0x38] sm:$0xff]
      %v1509 = vld [vmem:[%s237 + $0x40] sm:$0xff]
      %v1510 = vld [vmem:[%s237 + $0x48] sm:$0xff]
      %v1511 = vld [vmem:[%s237 + $0x50] sm:$0xff]
      %v1512 = vld [vmem:[%s237 + $0x58] sm:$0xff]
      %v1513 = vld [vmem:[%s237 + $0x60] sm:$0xff]
      %v1514 = vld [vmem:[%s237 + $0x68] sm:$0xff]
      %v1515 = vld [vmem:[%s237 + $0x70] sm:$0xff]
      %v1516 = vld [vmem:[%s237 + $0x78] sm:$0xff]
      %v1517 = vld [vmem:[%s237 + $0x80] sm:$0xff]
      %v1518 = vld [vmem:[%s237 + $0x88] sm:$0xff]
      %v1519 = vld [vmem:[%s237 + $0x90] sm:$0xff]
      %v1520 = vld [vmem:[%s237 + $0x98] sm:$0xff]
      %v1521 = vld [vmem:[%s237 + $0xa0] sm:$0xff]
      %v1522 = vld [vmem:[%s237 + $0xa8] sm:$0xff]
      %v1523 = vld [vmem:[%s237 + $0xb0] sm:$0xff]
      %v1524 = vld [vmem:[%s237 + $0xb8] sm:$0xff]
      %v1525 = vld [vmem:[%s237 + $0xc0] sm:$0xff]
      %v1526 = vld [vmem:[%s237 + $0xc8] sm:$0xff]
      %v1527 = vld [vmem:[%s237 + $0xd0] sm:$0xff]
      %v1528 = vld [vmem:[%s237 + $0xd8] sm:$0xff]
      %v1529 = vld [vmem:[%s237 + $0xe0] sm:$0xff]
      %v1530 = vld [vmem:[%s237 + $0xe8] sm:$0xff]
      %v1531 = vld [vmem:[%s237 + $0xf0] sm:$0xff]
      %v1532 = vld [vmem:[%s237 + $0xf8] sm:$0xff]
      %v1533 = vld [vmem:[%s237 + $0x100] sm:$0xff]
      %v1534 = vld [vmem:[%s237 + $0x108] sm:$0xff]
      %v1535 = vld [vmem:[%s237 + $0x110] sm:$0xff]
      %v1536 = vld [vmem:[%s237 + $0x118] sm:$0xff]
      %v1537 = vld [vmem:[%s237 + $0x120] sm:$0xff]
      %v1538 = vld [vmem:[%s237 + $0x128] sm:$0xff]
      %v1539 = vld [vmem:[%s237 + $0x130] sm:$0xff]
      %v1540 = vld [vmem:[%s237 + $0x138] sm:$0xff]
      %v1541 = vld [vmem:[%s237 + $0x140] sm:$0xff]
      %v1542 = vld [vmem:[%s237 + $0x148] sm:$0xff]
      %v1543 = vld [vmem:[%s237 + $0x150] sm:$0xff]
      %v1544 = vld [vmem:[%s237 + $0x158] sm:$0xff]
      %v1545 = vld [vmem:[%s237 + $0x160] sm:$0xff]
      %v1546 = vld [vmem:[%s237 + $0x168] sm:$0xff]
      %v1547 = vld [vmem:[%s237 + $0x170] sm:$0xff]
      %v1548 = vld [vmem:[%s237 + $0x178] sm:$0xff]
      %v1549 = vld [vmem:[%s237 + $0x180] sm:$0xff]
      %v1550 = vld [vmem:[%s237 + $0x188] sm:$0xff]
      %v1551 = vld [vmem:[%s237 + $0x190] sm:$0xff]
      %v1552 = vld [vmem:[%s237 + $0x198] sm:$0xff]
      %v1553 = vld [vmem:[%s237 + $0x1a0] sm:$0xff]
      %v1554 = vld [vmem:[%s237 + $0x1a8] sm:$0xff]
      %v1555 = vld [vmem:[%s237 + $0x1b0] sm:$0xff]
      %v1556 = vld [vmem:[%s237 + $0x1b8] sm:$0xff]
      %v1557 = vld [vmem:[%s237 + $0x1c0] sm:$0xff]
      %v1558 = vld [vmem:[%s237 + $0x1c8] sm:$0xff]
      %v1559 = vld [vmem:[%s237 + $0x1d0] sm:$0xff]
      %v1560 = vld [vmem:[%s237 + $0x1d8] sm:$0xff]
      %v1561 = vld [vmem:[%s237 + $0x1e0] sm:$0xff]
      %v1562 = vld [vmem:[%s237 + $0x1e8] sm:$0xff]
      %v1563 = vld [vmem:[%s237 + $0x1f0] sm:$0xff]
      %v1564 = vld [vmem:[%s237 + $0x1f8] sm:$0xff]
      %v1565 = vld [vmem:[%s237 + $0x200] sm:$0xff]
      %v1566 = vld [vmem:[%s237 + $0x208] sm:$0xff]
      %v1567 = vld [vmem:[%s237 + $0x210] sm:$0xff]
      %v1568 = vld [vmem:[%s237 + $0x218] sm:$0xff]
      %v1569 = vld [vmem:[%s237 + $0x220] sm:$0xff]
      %v1570 = vld [vmem:[%s237 + $0x228] sm:$0xff]
      %v1571 = vld [vmem:[%s237 + $0x230] sm:$0xff]
      %v1572 = vld [vmem:[%s237 + $0x238] sm:$0xff]
      %v1573 = vld [vmem:[%s237 + $0x240] sm:$0xff]
      %v1574 = vld [vmem:[%s237 + $0x248] sm:$0xff]
      %v1575 = vld [vmem:[%s237 + $0x250] sm:$0xff]
      %v1576 = vld [vmem:[%s237 + $0x258] sm:$0xff]
      %v1577 = vld [vmem:[%s237 + $0x260] sm:$0xff]
      %v1578 = vld [vmem:[%s237 + $0x268] sm:$0xff]
      %v1579 = vld [vmem:[%s237 + $0x270] sm:$0xff]
      %v1580 = vld [vmem:[%s237 + $0x278] sm:$0xff]
      %v1581 = vld [vmem:[%s237 + $0x280] sm:$0xff]
      %v1582 = vld [vmem:[%s237 + $0x288] sm:$0xff]
      %v1583 = vld [vmem:[%s237 + $0x290] sm:$0xff]
      %v1584 = vld [vmem:[%s237 + $0x298] sm:$0xff]
      %v1585 = vld [vmem:[%s237 + $0x2a0] sm:$0xff]
      %v1586 = vld [vmem:[%s237 + $0x2a8] sm:$0xff]
      %v1587 = vld [vmem:[%s237 + $0x2b0] sm:$0xff]
      %v1588 = vld [vmem:[%s237 + $0x2b8] sm:$0xff]
      %v1589 = vld [vmem:[%s237 + $0x2c0] sm:$0xff]
      %v1590 = vld [vmem:[%s237 + $0x2c8] sm:$0xff]
      %v1591 = vld [vmem:[%s237 + $0x2d0] sm:$0xff]
      %v1592 = vld [vmem:[%s237 + $0x2d8] sm:$0xff]
      %v1593 = vld [vmem:[%s237 + $0x2e0] sm:$0xff]
      %v1594 = vld [vmem:[%s237 + $0x2e8] sm:$0xff]
      %v1595 = vld [vmem:[%s237 + $0x2f0] sm:$0xff]
      %v1596 = vld [vmem:[%s237 + $0x2f8] sm:$0xff]
      %1598 = vset.pattern.permute.xlu0 0
      %1599 = vperm.xlu0 %1598, %v1310
      %v1600 = vpop.permute.xlu0 %1599
      %1603 = vset.pattern.permute.xlu0 0
      %1604 = vperm.xlu0 %1603, %v1312
      %v1605 = vpop.permute.xlu0 %1604
      %1608 = vset.pattern.permute.xlu0 0
      %1609 = vperm.xlu0 %1608, %v1314
      %v1610 = vpop.permute.xlu0 %1609
      %1613 = vset.pattern.permute.xlu0 0
      %1614 = vperm.xlu0 %1613, %v1316
      %v1615 = vpop.permute.xlu0 %1614
      %1618 = vset.pattern.permute.xlu0 0
      %1619 = vperm.xlu0 %1618, %v1318
      %v1620 = vpop.permute.xlu0 %1619
      %1623 = vset.pattern.permute.xlu0 0
      %1624 = vperm.xlu0 %1623, %v1320
      %v1625 = vpop.permute.xlu0 %1624
      %1628 = vset.pattern.permute.xlu0 0
      %1629 = vperm.xlu0 %1628, %v1322
      %v1630 = vpop.permute.xlu0 %1629
      %1633 = vset.pattern.permute.xlu0 0
      %1634 = vperm.xlu0 %1633, %v1324
      %v1635 = vpop.permute.xlu0 %1634
      %1638 = vset.pattern.permute.xlu0 0
      %1639 = vperm.xlu0 %1638, %v1326
      %v1640 = vpop.permute.xlu0 %1639
      %1643 = vset.pattern.permute.xlu0 0
      %1644 = vperm.xlu0 %1643, %v1328
      %v1645 = vpop.permute.xlu0 %1644
      %1648 = vset.pattern.permute.xlu0 0
      %1649 = vperm.xlu0 %1648, %v1330
      %v1650 = vpop.permute.xlu0 %1649
      %1653 = vset.pattern.permute.xlu0 0
      %1654 = vperm.xlu0 %1653, %v1332
      %v1655 = vpop.permute.xlu0 %1654
      %1658 = vset.pattern.permute.xlu0 0
      %1659 = vperm.xlu0 %1658, %v1334
      %v1660 = vpop.permute.xlu0 %1659
      %1663 = vset.pattern.permute.xlu0 0
      %1664 = vperm.xlu0 %1663, %v1336
      %v1665 = vpop.permute.xlu0 %1664
      %1668 = vset.pattern.permute.xlu0 0
      %1669 = vperm.xlu0 %1668, %v1338
      %v1670 = vpop.permute.xlu0 %1669
      %1673 = vset.pattern.permute.xlu0 0
      %1674 = vperm.xlu0 %1673, %v1340
      %v1675 = vpop.permute.xlu0 %1674
      %1678 = vset.pattern.permute.xlu0 0
      %1679 = vperm.xlu0 %1678, %v1342
      %v1680 = vpop.permute.xlu0 %1679
      %1683 = vset.pattern.permute.xlu0 0
      %1684 = vperm.xlu0 %1683, %v1344
      %v1685 = vpop.permute.xlu0 %1684
      %1688 = vset.pattern.permute.xlu0 0
      %1689 = vperm.xlu0 %1688, %v1346
      %v1690 = vpop.permute.xlu0 %1689
      %1693 = vset.pattern.permute.xlu0 0
      %1694 = vperm.xlu0 %1693, %v1348
      %v1695 = vpop.permute.xlu0 %1694
      %1698 = vset.pattern.permute.xlu0 0
      %1699 = vperm.xlu0 %1698, %v1350
      %v1700 = vpop.permute.xlu0 %1699
      %1703 = vset.pattern.permute.xlu0 0
      %1704 = vperm.xlu0 %1703, %v1352
      %v1705 = vpop.permute.xlu0 %1704
      %1708 = vset.pattern.permute.xlu0 0
      %1709 = vperm.xlu0 %1708, %v1354
      %v1710 = vpop.permute.xlu0 %1709
      %1713 = vset.pattern.permute.xlu0 0
      %1714 = vperm.xlu0 %1713, %v1356
      %v1715 = vpop.permute.xlu0 %1714
      %1718 = vset.pattern.permute.xlu0 0
      %1719 = vperm.xlu0 %1718, %v1358
      %v1720 = vpop.permute.xlu0 %1719
      %1723 = vset.pattern.permute.xlu0 0
      %1724 = vperm.xlu0 %1723, %v1360
      %v1725 = vpop.permute.xlu0 %1724
      %1728 = vset.pattern.permute.xlu0 0
      %1729 = vperm.xlu0 %1728, %v1362
      %v1730 = vpop.permute.xlu0 %1729
      %1733 = vset.pattern.permute.xlu0 0
      %1734 = vperm.xlu0 %1733, %v1364
      %v1735 = vpop.permute.xlu0 %1734
      %1738 = vset.pattern.permute.xlu0 0
      %1739 = vperm.xlu0 %1738, %v1366
      %v1740 = vpop.permute.xlu0 %1739
      %1743 = vset.pattern.permute.xlu0 0
      %1744 = vperm.xlu0 %1743, %v1368
      %v1745 = vpop.permute.xlu0 %1744
      %1748 = vset.pattern.permute.xlu0 0
      %1749 = vperm.xlu0 %1748, %v1370
      %v1750 = vpop.permute.xlu0 %1749
      %1753 = vset.pattern.permute.xlu0 0
      %1754 = vperm.xlu0 %1753, %v1372
      %v1755 = vpop.permute.xlu0 %1754
      %1758 = vset.pattern.permute.xlu0 0
      %1759 = vperm.xlu0 %1758, %v1374
      %v1760 = vpop.permute.xlu0 %1759
      %1763 = vset.pattern.permute.xlu0 0
      %1764 = vperm.xlu0 %1763, %v1376
      %v1765 = vpop.permute.xlu0 %1764
      %1768 = vset.pattern.permute.xlu0 0
      %1769 = vperm.xlu0 %1768, %v1378
      %v1770 = vpop.permute.xlu0 %1769
      %1773 = vset.pattern.permute.xlu0 0
      %1774 = vperm.xlu0 %1773, %v1380
      %v1775 = vpop.permute.xlu0 %1774
      %1778 = vset.pattern.permute.xlu0 0
      %1779 = vperm.xlu0 %1778, %v1382
      %v1780 = vpop.permute.xlu0 %1779
      %1783 = vset.pattern.permute.xlu0 0
      %1784 = vperm.xlu0 %1783, %v1384
      %v1785 = vpop.permute.xlu0 %1784
      %1788 = vset.pattern.permute.xlu0 0
      %1789 = vperm.xlu0 %1788, %v1386
      %v1790 = vpop.permute.xlu0 %1789
      %1793 = vset.pattern.permute.xlu0 0
      %1794 = vperm.xlu0 %1793, %v1388
      %v1795 = vpop.permute.xlu0 %1794
      %1798 = vset.pattern.permute.xlu0 0
      %1799 = vperm.xlu0 %1798, %v1390
      %v1800 = vpop.permute.xlu0 %1799
      %1803 = vset.pattern.permute.xlu0 0
      %1804 = vperm.xlu0 %1803, %v1392
      %v1805 = vpop.permute.xlu0 %1804
      %1808 = vset.pattern.permute.xlu0 0
      %1809 = vperm.xlu0 %1808, %v1394
      %v1810 = vpop.permute.xlu0 %1809
      %1813 = vset.pattern.permute.xlu0 0
      %1814 = vperm.xlu0 %1813, %v1396
      %v1815 = vpop.permute.xlu0 %1814
      %1818 = vset.pattern.permute.xlu0 0
      %1819 = vperm.xlu0 %1818, %v1398
      %v1820 = vpop.permute.xlu0 %1819
      %1823 = vset.pattern.permute.xlu0 0
      %1824 = vperm.xlu0 %1823, %v1400
      %v1825 = vpop.permute.xlu0 %1824
      %1828 = vset.pattern.permute.xlu0 0
      %1829 = vperm.xlu0 %1828, %v1402
      %v1830 = vpop.permute.xlu0 %1829
      %1833 = vset.pattern.permute.xlu0 0
      %1834 = vperm.xlu0 %1833, %v1404
      %v1835 = vpop.permute.xlu0 %1834
      %1838 = vset.pattern.permute.xlu0 0
      %1839 = vperm.xlu0 %1838, %v1406
      %v1840 = vpop.permute.xlu0 %1839
      %1843 = vset.pattern.permute.xlu0 0
      %1844 = vperm.xlu0 %1843, %v1408
      %v1845 = vpop.permute.xlu0 %1844
      %1848 = vset.pattern.permute.xlu0 0
      %1849 = vperm.xlu0 %1848, %v1410
      %v1850 = vpop.permute.xlu0 %1849
      %1853 = vset.pattern.permute.xlu0 0
      %1854 = vperm.xlu0 %1853, %v1412
      %v1855 = vpop.permute.xlu0 %1854
      %1858 = vset.pattern.permute.xlu0 0
      %1859 = vperm.xlu0 %1858, %v1414
      %v1860 = vpop.permute.xlu0 %1859
      %1863 = vset.pattern.permute.xlu0 0
      %1864 = vperm.xlu0 %1863, %v1416
      %v1865 = vpop.permute.xlu0 %1864
      %1868 = vset.pattern.permute.xlu0 0
      %1869 = vperm.xlu0 %1868, %v1418
      %v1870 = vpop.permute.xlu0 %1869
      %1873 = vset.pattern.permute.xlu0 0
      %1874 = vperm.xlu0 %1873, %v1420
      %v1875 = vpop.permute.xlu0 %1874
      %1878 = vset.pattern.permute.xlu0 0
      %1879 = vperm.xlu0 %1878, %v1422
      %v1880 = vpop.permute.xlu0 %1879
      %1883 = vset.pattern.permute.xlu0 0
      %1884 = vperm.xlu0 %1883, %v1424
      %v1885 = vpop.permute.xlu0 %1884
      %1888 = vset.pattern.permute.xlu0 0
      %1889 = vperm.xlu0 %1888, %v1426
      %v1890 = vpop.permute.xlu0 %1889
      %1893 = vset.pattern.permute.xlu0 0
      %1894 = vperm.xlu0 %1893, %v1428
      %v1895 = vpop.permute.xlu0 %1894
      %1898 = vset.pattern.permute.xlu0 0
      %1899 = vperm.xlu0 %1898, %v1430
      %v1900 = vpop.permute.xlu0 %1899
      %1903 = vset.pattern.permute.xlu0 0
      %1904 = vperm.xlu0 %1903, %v1432
      %v1905 = vpop.permute.xlu0 %1904
      %1908 = vset.pattern.permute.xlu0 0
      %1909 = vperm.xlu0 %1908, %v1434
      %v1910 = vpop.permute.xlu0 %1909
      %1913 = vset.pattern.permute.xlu0 0
      %1914 = vperm.xlu0 %1913, %v1436
      %v1915 = vpop.permute.xlu0 %1914
      %1918 = vset.pattern.permute.xlu0 0
      %1919 = vperm.xlu0 %1918, %v1438
      %v1920 = vpop.permute.xlu0 %1919
      %1923 = vset.pattern.permute.xlu0 0
      %1924 = vperm.xlu0 %1923, %v1440
      %v1925 = vpop.permute.xlu0 %1924
      %1928 = vset.pattern.permute.xlu0 0
      %1929 = vperm.xlu0 %1928, %v1442
      %v1930 = vpop.permute.xlu0 %1929
      %1933 = vset.pattern.permute.xlu0 0
      %1934 = vperm.xlu0 %1933, %v1444
      %v1935 = vpop.permute.xlu0 %1934
      %1938 = vset.pattern.permute.xlu0 0
      %1939 = vperm.xlu0 %1938, %v1446
      %v1940 = vpop.permute.xlu0 %1939
      %1943 = vset.pattern.permute.xlu0 0
      %1944 = vperm.xlu0 %1943, %v1448
      %v1945 = vpop.permute.xlu0 %1944
      %1948 = vset.pattern.permute.xlu0 0
      %1949 = vperm.xlu0 %1948, %v1450
      %v1950 = vpop.permute.xlu0 %1949
      %1953 = vset.pattern.permute.xlu0 0
      %1954 = vperm.xlu0 %1953, %v1452
      %v1955 = vpop.permute.xlu0 %1954
      %1958 = vset.pattern.permute.xlu0 0
      %1959 = vperm.xlu0 %1958, %v1454
      %v1960 = vpop.permute.xlu0 %1959
      %1963 = vset.pattern.permute.xlu0 0
      %1964 = vperm.xlu0 %1963, %v1456
      %v1965 = vpop.permute.xlu0 %1964
      %1968 = vset.pattern.permute.xlu0 0
      %1969 = vperm.xlu0 %1968, %v1458
      %v1970 = vpop.permute.xlu0 %1969
      %1973 = vset.pattern.permute.xlu0 0
      %1974 = vperm.xlu0 %1973, %v1460
      %v1975 = vpop.permute.xlu0 %1974
      %1978 = vset.pattern.permute.xlu0 0
      %1979 = vperm.xlu0 %1978, %v1462
      %v1980 = vpop.permute.xlu0 %1979
      %1983 = vset.pattern.permute.xlu0 0
      %1984 = vperm.xlu0 %1983, %v1464
      %v1985 = vpop.permute.xlu0 %1984
      %1988 = vset.pattern.permute.xlu0 0
      %1989 = vperm.xlu0 %1988, %v1466
      %v1990 = vpop.permute.xlu0 %1989
      %1993 = vset.pattern.permute.xlu0 0
      %1994 = vperm.xlu0 %1993, %v1468
      %v1995 = vpop.permute.xlu0 %1994
      %1998 = vset.pattern.permute.xlu0 0
      %1999 = vperm.xlu0 %1998, %v1470
      %v2000 = vpop.permute.xlu0 %1999
      %2003 = vset.pattern.permute.xlu0 0
      %2004 = vperm.xlu0 %2003, %v1472
      %v2005 = vpop.permute.xlu0 %2004
      %2008 = vset.pattern.permute.xlu0 0
      %2009 = vperm.xlu0 %2008, %v1474
      %v2010 = vpop.permute.xlu0 %2009
      %2013 = vset.pattern.permute.xlu0 0
      %2014 = vperm.xlu0 %2013, %v1476
      %v2015 = vpop.permute.xlu0 %2014
      %2018 = vset.pattern.permute.xlu0 0
      %2019 = vperm.xlu0 %2018, %v1478
      %v2020 = vpop.permute.xlu0 %2019
      %2023 = vset.pattern.permute.xlu0 0
      %2024 = vperm.xlu0 %2023, %v1480
      %v2025 = vpop.permute.xlu0 %2024
      %2028 = vset.pattern.permute.xlu0 0
      %2029 = vperm.xlu0 %2028, %v1482
      %v2030 = vpop.permute.xlu0 %2029
      %2033 = vset.pattern.permute.xlu0 0
      %2034 = vperm.xlu0 %2033, %v1484
      %v2035 = vpop.permute.xlu0 %2034
      %2038 = vset.pattern.permute.xlu0 0
      %2039 = vperm.xlu0 %2038, %v1486
      %v2040 = vpop.permute.xlu0 %2039
      %2043 = vset.pattern.permute.xlu0 0
      %2044 = vperm.xlu0 %2043, %v1488
      %v2045 = vpop.permute.xlu0 %2044
      %2048 = vset.pattern.permute.xlu0 0
      %2049 = vperm.xlu0 %2048, %v1490
      %v2050 = vpop.permute.xlu0 %2049
      %2053 = vset.pattern.permute.xlu0 0
      %2054 = vperm.xlu0 %2053, %v1492
      %v2055 = vpop.permute.xlu0 %2054
      %2058 = vset.pattern.permute.xlu0 0
      %2059 = vperm.xlu0 %2058, %v1494
      %v2060 = vpop.permute.xlu0 %2059
      %2063 = vset.pattern.permute.xlu0 0
      %2064 = vperm.xlu0 %2063, %v1496
      %v2065 = vpop.permute.xlu0 %2064
      %2068 = vset.pattern.permute.xlu0 0
      %2069 = vperm.xlu0 %2068, %v1498
      %v2070 = vpop.permute.xlu0 %2069
      %2073 = vset.pattern.permute.xlu0 0
      %2074 = vperm.xlu0 %2073, %v1500
      %v2075 = vpop.permute.xlu0 %2074
      %v2077 = vmul.f32 %v1501, %v1600
      %v2078 = vmul.f32 %v1502, %v1605
      %v2079 = vmul.f32 %v1503, %v1610
      %v2080 = vmul.f32 %v1504, %v1615
      %v2081 = vmul.f32 %v1505, %v1620
      %v2082 = vmul.f32 %v1506, %v1625
      %v2083 = vmul.f32 %v1507, %v1630
      %v2084 = vmul.f32 %v1508, %v1635
      %v2085 = vmul.f32 %v1509, %v1640
      %v2086 = vmul.f32 %v1510, %v1645
      %v2087 = vmul.f32 %v1511, %v1650
      %v2088 = vmul.f32 %v1512, %v1655
      %v2089 = vmul.f32 %v1513, %v1660
      %v2090 = vmul.f32 %v1514, %v1665
      %v2091 = vmul.f32 %v1515, %v1670
      %v2092 = vmul.f32 %v1516, %v1675
      %v2093 = vmul.f32 %v1517, %v1680
      %v2094 = vmul.f32 %v1518, %v1685
      %v2095 = vmul.f32 %v1519, %v1690
      %v2096 = vmul.f32 %v1520, %v1695
      %v2097 = vmul.f32 %v1521, %v1700
      %v2098 = vmul.f32 %v1522, %v1705
      %v2099 = vmul.f32 %v1523, %v1710
      %v2100 = vmul.f32 %v1524, %v1715
      %v2101 = vmul.f32 %v1525, %v1720
      %v2102 = vmul.f32 %v1526, %v1725
      %v2103 = vmul.f32 %v1527, %v1730
      %v2104 = vmul.f32 %v1528, %v1735
      %v2105 = vmul.f32 %v1529, %v1740
      %v2106 = vmul.f32 %v1530, %v1745
      %v2107 = vmul.f32 %v1531, %v1750
      %v2108 = vmul.f32 %v1532, %v1755
      %v2109 = vmul.f32 %v1533, %v1760
      %v2110 = vmul.f32 %v1534, %v1765
      %v2111 = vmul.f32 %v1535, %v1770
      %v2112 = vmul.f32 %v1536, %v1775
      %v2113 = vmul.f32 %v1537, %v1780
      %v2114 = vmul.f32 %v1538, %v1785
      %v2115 = vmul.f32 %v1539, %v1790
      %v2116 = vmul.f32 %v1540, %v1795
      %v2117 = vmul.f32 %v1541, %v1800
      %v2118 = vmul.f32 %v1542, %v1805
      %v2119 = vmul.f32 %v1543, %v1810
      %v2120 = vmul.f32 %v1544, %v1815
      %v2121 = vmul.f32 %v1545, %v1820
      %v2122 = vmul.f32 %v1546, %v1825
      %v2123 = vmul.f32 %v1547, %v1830
      %v2124 = vmul.f32 %v1548, %v1835
      %v2125 = vmul.f32 %v1549, %v1840
      %v2126 = vmul.f32 %v1550, %v1845
      %v2127 = vmul.f32 %v1551, %v1850
      %v2128 = vmul.f32 %v1552, %v1855
      %v2129 = vmul.f32 %v1553, %v1860
      %v2130 = vmul.f32 %v1554, %v1865
      %v2131 = vmul.f32 %v1555, %v1870
      %v2132 = vmul.f32 %v1556, %v1875
      %v2133 = vmul.f32 %v1557, %v1880
      %v2134 = vmul.f32 %v1558, %v1885
      %v2135 = vmul.f32 %v1559, %v1890
      %v2136 = vmul.f32 %v1560, %v1895
      %v2137 = vmul.f32 %v1561, %v1900
      %v2138 = vmul.f32 %v1562, %v1905
      %v2139 = vmul.f32 %v1563, %v1910
      %v2140 = vmul.f32 %v1564, %v1915
      %v2141 = vmul.f32 %v1565, %v1920
      %v2142 = vmul.f32 %v1566, %v1925
      %v2143 = vmul.f32 %v1567, %v1930
      %v2144 = vmul.f32 %v1568, %v1935
      %v2145 = vmul.f32 %v1569, %v1940
      %v2146 = vmul.f32 %v1570, %v1945
      %v2147 = vmul.f32 %v1571, %v1950
      %v2148 = vmul.f32 %v1572, %v1955
      %v2149 = vmul.f32 %v1573, %v1960
      %v2150 = vmul.f32 %v1574, %v1965
      %v2151 = vmul.f32 %v1575, %v1970
      %v2152 = vmul.f32 %v1576, %v1975
      %v2153 = vmul.f32 %v1577, %v1980
      %v2154 = vmul.f32 %v1578, %v1985
      %v2155 = vmul.f32 %v1579, %v1990
      %v2156 = vmul.f32 %v1580, %v1995
      %v2157 = vmul.f32 %v1581, %v2000
      %v2158 = vmul.f32 %v1582, %v2005
      %v2159 = vmul.f32 %v1583, %v2010
      %v2160 = vmul.f32 %v1584, %v2015
      %v2161 = vmul.f32 %v1585, %v2020
      %v2162 = vmul.f32 %v1586, %v2025
      %v2163 = vmul.f32 %v1587, %v2030
      %v2164 = vmul.f32 %v1588, %v2035
      %v2165 = vmul.f32 %v1589, %v2040
      %v2166 = vmul.f32 %v1590, %v2045
      %v2167 = vmul.f32 %v1591, %v2050
      %v2168 = vmul.f32 %v1592, %v2055
      %v2169 = vmul.f32 %v1593, %v2060
      %v2170 = vmul.f32 %v1594, %v2065
      %v2171 = vmul.f32 %v1595, %v2070
      %v2172 = vmul.f32 %v1596, %v2075
      %vm2173 = vcmask 400384
      %2174 = vst.msk [vmem:[%s243] sm:$0xff] %vm2173, %v2077
      %2175 = vst.msk [vmem:[%s243 + $0x8] sm:$0xff] %vm2173, %v2078
      %2176 = vst.msk [vmem:[%s243 + $0x10] sm:$0xff] %vm2173, %v2079
      %2177 = vst.msk [vmem:[%s243 + $0x18] sm:$0xff] %vm2173, %v2080
      %2178 = vst.msk [vmem:[%s243 + $0x20] sm:$0xff] %vm2173, %v2081
      %2179 = vst.msk [vmem:[%s243 + $0x28] sm:$0xff] %vm2173, %v2082
      %2180 = vst.msk [vmem:[%s243 + $0x30] sm:$0xff] %vm2173, %v2083
      %2181 = vst.msk [vmem:[%s243 + $0x38] sm:$0xff] %vm2173, %v2084
      %2182 = vst.msk [vmem:[%s243 + $0x40] sm:$0xff] %vm2173, %v2085
      %2183 = vst.msk [vmem:[%s243 + $0x48] sm:$0xff] %vm2173, %v2086
      %2184 = vst.msk [vmem:[%s243 + $0x50] sm:$0xff] %vm2173, %v2087
      %2185 = vst.msk [vmem:[%s243 + $0x58] sm:$0xff] %vm2173, %v2088
      %2186 = vst.msk [vmem:[%s243 + $0x60] sm:$0xff] %vm2173, %v2089
      %2187 = vst.msk [vmem:[%s243 + $0x68] sm:$0xff] %vm2173, %v2090
      %2188 = vst.msk [vmem:[%s243 + $0x70] sm:$0xff] %vm2173, %v2091
      %2189 = vst.msk [vmem:[%s243 + $0x78] sm:$0xff] %vm2173, %v2092
      %2190 = vst.msk [vmem:[%s243 + $0x80] sm:$0xff] %vm2173, %v2093
      %2191 = vst.msk [vmem:[%s243 + $0x88] sm:$0xff] %vm2173, %v2094
      %2192 = vst.msk [vmem:[%s243 + $0x90] sm:$0xff] %vm2173, %v2095
      %2193 = vst.msk [vmem:[%s243 + $0x98] sm:$0xff] %vm2173, %v2096
      %2194 = vst.msk [vmem:[%s243 + $0xa0] sm:$0xff] %vm2173, %v2097
      %2195 = vst.msk [vmem:[%s243 + $0xa8] sm:$0xff] %vm2173, %v2098
      %2196 = vst.msk [vmem:[%s243 + $0xb0] sm:$0xff] %vm2173, %v2099
      %2197 = vst.msk [vmem:[%s243 + $0xb8] sm:$0xff] %vm2173, %v2100
      %2198 = vst.msk [vmem:[%s243 + $0xc0] sm:$0xff] %vm2173, %v2101
      %2199 = vst.msk [vmem:[%s243 + $0xc8] sm:$0xff] %vm2173, %v2102
      %2200 = vst.msk [vmem:[%s243 + $0xd0] sm:$0xff] %vm2173, %v2103
      %2201 = vst.msk [vmem:[%s243 + $0xd8] sm:$0xff] %vm2173, %v2104
      %2202 = vst.msk [vmem:[%s243 + $0xe0] sm:$0xff] %vm2173, %v2105
      %2203 = vst.msk [vmem:[%s243 + $0xe8] sm:$0xff] %vm2173, %v2106
      %2204 = vst.msk [vmem:[%s243 + $0xf0] sm:$0xff] %vm2173, %v2107
      %2205 = vst.msk [vmem:[%s243 + $0xf8] sm:$0xff] %vm2173, %v2108
      %2206 = vst.msk [vmem:[%s243 + $0x100] sm:$0xff] %vm2173, %v2109
      %2207 = vst.msk [vmem:[%s243 + $0x108] sm:$0xff] %vm2173, %v2110
      %2208 = vst.msk [vmem:[%s243 + $0x110] sm:$0xff] %vm2173, %v2111
      %2209 = vst.msk [vmem:[%s243 + $0x118] sm:$0xff] %vm2173, %v2112
      %2210 = vst.msk [vmem:[%s243 + $0x120] sm:$0xff] %vm2173, %v2113
      %2211 = vst.msk [vmem:[%s243 + $0x128] sm:$0xff] %vm2173, %v2114
      %2212 = vst.msk [vmem:[%s243 + $0x130] sm:$0xff] %vm2173, %v2115
      %2213 = vst.msk [vmem:[%s243 + $0x138] sm:$0xff] %vm2173, %v2116
      %2214 = vst.msk [vmem:[%s243 + $0x140] sm:$0xff] %vm2173, %v2117
      %2215 = vst.msk [vmem:[%s243 + $0x148] sm:$0xff] %vm2173, %v2118
      %2216 = vst.msk [vmem:[%s243 + $0x150] sm:$0xff] %vm2173, %v2119
      %2217 = vst.msk [vmem:[%s243 + $0x158] sm:$0xff] %vm2173, %v2120
      %2218 = vst.msk [vmem:[%s243 + $0x160] sm:$0xff] %vm2173, %v2121
      %2219 = vst.msk [vmem:[%s243 + $0x168] sm:$0xff] %vm2173, %v2122
      %2220 = vst.msk [vmem:[%s243 + $0x170] sm:$0xff] %vm2173, %v2123
      %2221 = vst.msk [vmem:[%s243 + $0x178] sm:$0xff] %vm2173, %v2124
      %2222 = vst.msk [vmem:[%s243 + $0x180] sm:$0xff] %vm2173, %v2125
      %2223 = vst.msk [vmem:[%s243 + $0x188] sm:$0xff] %vm2173, %v2126
      %2224 = vst.msk [vmem:[%s243 + $0x190] sm:$0xff] %vm2173, %v2127
      %2225 = vst.msk [vmem:[%s243 + $0x198] sm:$0xff] %vm2173, %v2128
      %2226 = vst.msk [vmem:[%s243 + $0x1a0] sm:$0xff] %vm2173, %v2129
      %2227 = vst.msk [vmem:[%s243 + $0x1a8] sm:$0xff] %vm2173, %v2130
      %2228 = vst.msk [vmem:[%s243 + $0x1b0] sm:$0xff] %vm2173, %v2131
      %2229 = vst.msk [vmem:[%s243 + $0x1b8] sm:$0xff] %vm2173, %v2132
      %2230 = vst.msk [vmem:[%s243 + $0x1c0] sm:$0xff] %vm2173, %v2133
      %2231 = vst.msk [vmem:[%s243 + $0x1c8] sm:$0xff] %vm2173, %v2134
      %2232 = vst.msk [vmem:[%s243 + $0x1d0] sm:$0xff] %vm2173, %v2135
      %2233 = vst.msk [vmem:[%s243 + $0x1d8] sm:$0xff] %vm2173, %v2136
      %2234 = vst.msk [vmem:[%s243 + $0x1e0] sm:$0xff] %vm2173, %v2137
      %2235 = vst.msk [vmem:[%s243 + $0x1e8] sm:$0xff] %vm2173, %v2138
      %2236 = vst.msk [vmem:[%s243 + $0x1f0] sm:$0xff] %vm2173, %v2139
      %2237 = vst.msk [vmem:[%s243 + $0x1f8] sm:$0xff] %vm2173, %v2140
      %2238 = vst.msk [vmem:[%s243 + $0x200] sm:$0xff] %vm2173, %v2141
      %2239 = vst.msk [vmem:[%s243 + $0x208] sm:$0xff] %vm2173, %v2142
      %2240 = vst.msk [vmem:[%s243 + $0x210] sm:$0xff] %vm2173, %v2143
      %2241 = vst.msk [vmem:[%s243 + $0x218] sm:$0xff] %vm2173, %v2144
      %2242 = vst.msk [vmem:[%s243 + $0x220] sm:$0xff] %vm2173, %v2145
      %2243 = vst.msk [vmem:[%s243 + $0x228] sm:$0xff] %vm2173, %v2146
      %2244 = vst.msk [vmem:[%s243 + $0x230] sm:$0xff] %vm2173, %v2147
      %2245 = vst.msk [vmem:[%s243 + $0x238] sm:$0xff] %vm2173, %v2148
      %2246 = vst.msk [vmem:[%s243 + $0x240] sm:$0xff] %vm2173, %v2149
      %2247 = vst.msk [vmem:[%s243 + $0x248] sm:$0xff] %vm2173, %v2150
      %2248 = vst.msk [vmem:[%s243 + $0x250] sm:$0xff] %vm2173, %v2151
      %2249 = vst.msk [vmem:[%s243 + $0x258] sm:$0xff] %vm2173, %v2152
      %2250 = vst.msk [vmem:[%s243 + $0x260] sm:$0xff] %vm2173, %v2153
      %2251 = vst.msk [vmem:[%s243 + $0x268] sm:$0xff] %vm2173, %v2154
      %2252 = vst.msk [vmem:[%s243 + $0x270] sm:$0xff] %vm2173, %v2155
      %2253 = vst.msk [vmem:[%s243 + $0x278] sm:$0xff] %vm2173, %v2156
      %2254 = vst.msk [vmem:[%s243 + $0x280] sm:$0xff] %vm2173, %v2157
      %2255 = vst.msk [vmem:[%s243 + $0x288] sm:$0xff] %vm2173, %v2158
      %2256 = vst.msk [vmem:[%s243 + $0x290] sm:$0xff] %vm2173, %v2159
      %2257 = vst.msk [vmem:[%s243 + $0x298] sm:$0xff] %vm2173, %v2160
      %2258 = vst.msk [vmem:[%s243 + $0x2a0] sm:$0xff] %vm2173, %v2161
      %2259 = vst.msk [vmem:[%s243 + $0x2a8] sm:$0xff] %vm2173, %v2162
      %2260 = vst.msk [vmem:[%s243 + $0x2b0] sm:$0xff] %vm2173, %v2163
      %2261 = vst.msk [vmem:[%s243 + $0x2b8] sm:$0xff] %vm2173, %v2164
      %2262 = vst.msk [vmem:[%s243 + $0x2c0] sm:$0xff] %vm2173, %v2165
      %2263 = vst.msk [vmem:[%s243 + $0x2c8] sm:$0xff] %vm2173, %v2166
      %2264 = vst.msk [vmem:[%s243 + $0x2d0] sm:$0xff] %vm2173, %v2167
      %2265 = vst.msk [vmem:[%s243 + $0x2d8] sm:$0xff] %vm2173, %v2168
      %2266 = vst.msk [vmem:[%s243 + $0x2e0] sm:$0xff] %vm2173, %v2169
      %2267 = vst.msk [vmem:[%s243 + $0x2e8] sm:$0xff] %vm2173, %v2170
      %2268 = vst.msk [vmem:[%s243 + $0x2f0] sm:$0xff] %vm2173, %v2171
      %2269 = vst.msk [vmem:[%s243 + $0x2f8] sm:$0xff] %vm2173, %v2172
      %s2270 = smul.u32 96, %s15
      %p2271 = scmp.lt.s32.totalorder %s2270, 191
      %s2272 = scalar_select %p2271, %s2270, 191
      %s2273 = smul.addr %s2272, 8
      %s2274 = scalar_lea.vmem %s4, %s2273
      // Predicated region
      $region37: #{tpu_custom_call.1} parent=35 // pred_check
        %p2275 = pneg %p132
      $region38: #{tpu_custom_call.1} parent=35 // pred_check_branch
        %2277 = sbr.rel (%p2275) target = $region40
      $region39: #{tpu_custom_call.1} parent=35 // pred_region
        %s2278 = smul.u32 96, %s15
      $region40: #{tpu_custom_call.1} parent=35 // pred_fallthru
        _
    $region36: #{tpu_custom_call.1} parent=5 // pred_fallthru
      _
    %p2279 = scmp.le.s32.totalorder 2, %s10
    // Predicated region
    $region41: #{tpu_custom_call.1} parent=5 // pred_check
      %p2280 = pneg %p2279
    $region42: #{tpu_custom_call.1} parent=5 // pred_check_branch
      %2282 = sbr.rel (%p2280) target = $region44
    $region43: #{tpu_custom_call.1} parent=5 // pred_region
      %s2283 = ssub.s32 %s10, 2
      // Predicated region
      $region45: #{tpu_custom_call.1} parent=43 // pred_check
        %p2284 = pneg %p138
      $region46: #{tpu_custom_call.1} parent=43 // pred_check_branch
        %2286 = sbr.rel (%p2284) target = $region48
      $region47: #{tpu_custom_call.1} parent=43 // pred_region
        %s2287 = smul.u32 96, %s16
        %p2288 = scmp.lt.s32.totalorder %s2287, 191
        %s2289 = scalar_select %p2288, %s2287, 191
        %s2290 = smul.addr %s2289, 8
        %s2291 = scalar_lea.vmem %s4, %s2290
      $region48: #{tpu_custom_call.1} parent=43 // pred_fallthru
        _
    $region44: #{tpu_custom_call.1} parent=5 // pred_fallthru
      _
  $region6: #{tpu_custom_call.1} parent=0 // loop_footer
    %s14 = sadd.s32 1, %s10
  $region7: #{tpu_custom_call.1} parent=0 // loop_footer_branch
    %9 = sbr.rel target = $region3
  $region8: #{tpu_custom_call.1} parent=0 // loop_exit
    _

</llo_original>
